<compile_context>
chip_gen: v5e
topology: v5e:2x2
jax: 0.10.0
libtpu: 0.0.40
codegen_flags: <defaults>
</compile_context>

<pallas_src>
from functools import partial

import jax
import jax.numpy as jnp
from jax.experimental import pallas as pl
from jax.experimental.pallas import tpu as pltpu


def _round_up(x, m):
    return (x + m - 1) // m * m


def dynamic_mlp_c_kernel(img_ref, loc_ref, w_img_ref, w_loc_ref, ba_ref,
                         w12_ref, b12_ref, w22g_ref, b22m_ref,
                         gamma_ref, beta_ref, w3_ref, b3_ref, out_ref,
                         *, inplanes, planes, group, eps):
    n_groups = inplanes // group

    img = img_ref[...].astype(jnp.bfloat16)            # (TM, inplanes)
    loc = loc_ref[...].astype(jnp.bfloat16)            # (TM, loc_planes)

    # Fused conv11 || conv21, split by input source (no concatenated input).
    h = (jnp.dot(img, w_img_ref[...], preferred_element_type=jnp.float32)
         + jnp.dot(loc, w_loc_ref[...], preferred_element_type=jnp.float32)
         + ba_ref[...])
    h = jnp.maximum(h, 0.0)                             # (TM, 2*inplanes) f32
    h11 = h[:, :inplanes].astype(jnp.bfloat16)
    h21f = h[:, inplanes:]                              # (TM, inplanes) f32

    # conv12
    w12v = (jnp.dot(h11, w12_ref[...], preferred_element_type=jnp.float32)
            + b12_ref[...])                             # (TM, inplanes) f32

    # conv22 bias folded through the MXU:
    #   sum_c w12v[m,c] * b22[c,p]  ==  w12v @ b22m
    acc = jnp.dot(w12v.astype(jnp.bfloat16), b22m_ref[...],
                  preferred_element_type=jnp.float32)   # (TM, planes) f32

    # Streaming grouped bilinear: never materialize (TM, inplanes*planes).
    for g in range(n_groups):
        parts = []
        for j in range(group):
            c = g * group + j
            parts.append((w12v[:, c:c + 1] * h21f).astype(jnp.bfloat16))
        lhs = parts[0] if group == 1 else jnp.concatenate(parts, axis=-1)
        acc = acc + jnp.dot(lhs, w22g_ref[g],
                            preferred_element_type=jnp.float32)

    # br = LayerNorm(planes) + ReLU, gamma folded into the rsqrt scale.
    mean = jnp.mean(acc, axis=-1, keepdims=True)
    centered = acc - mean
    var = jnp.mean(centered * centered, axis=-1, keepdims=True)
    scale = jax.lax.rsqrt(var + eps) * gamma_ref[...]
    act = jnp.maximum(centered * scale + beta_ref[...], 0.0)

    # conv3 (no activation)
    out = (jnp.dot(act.astype(jnp.bfloat16), w3_ref[...],
                   preferred_element_type=jnp.float32) + b3_ref[...])
    out_ref[...] = out.astype(out_ref.dtype)


def dynamic_mlp_c(img_fea, loc_fea, params, *, inplanes, planes,
                  tm=1024, group=8, eps=1e-5,
                  vmem_limit_bytes=48 * 1024 * 1024):
    """img_fea: (B, N, inplanes), loc_fea: (B, N, loc_planes) -> (B, N, planes)."""
    B, N, C = img_fea.shape
    assert C == inplanes
    loc_planes = loc_fea.shape[-1]
    M = B * N

    img2d = img_fea.reshape(M, inplanes)
    loc2d = loc_fea.reshape(M, loc_planes)

    # Row tile: multiple of 8, capped at `tm`; keep >= 2 tiles when possible
    # so the "parallel" grid axis can feed both v7x TensorCores.
    tm_eff = max(8, _round_up(min(tm, _round_up(M, 8)), 8))
    if M > 8 and pl.cdiv(M, tm_eff) < 2:
        tm_eff = _round_up(pl.cdiv(M, 2), 8)
    num_tiles = pl.cdiv(M, tm_eff)

    if inplanes % group != 0:
        group = 1
    n_groups = inplanes // group

    bf16 = lambda x: x.astype(jnp.bfloat16)

    # conv11 / conv21 fused, split into img / loc halves of the input dim.
    w_a = jnp.concatenate([params["w11"], params["w21"]], axis=1)  # (cin, 2*inplanes)
    w_img = bf16(w_a[:inplanes])
    w_loc = bf16(w_a[inplanes:])
    ba = jnp.concatenate([params["b11"], params["b21"]], axis=1)   # (1, 2*inplanes)

    # conv22 weight regrouped for the streaming bilinear:
    #   w22g[g, j*inplanes + k, p] = w22[k, (g*group + j)*planes + p]
    w22_ckp = jnp.transpose(params["w22"].reshape(inplanes, inplanes, planes),
                            (1, 0, 2))                              # [c, k, p]
    w22g = bf16(w22_ckp.reshape(n_groups, group * inplanes, planes))
    b22m = bf16(params["b22"].reshape(inplanes, planes))            # [c, p]

    args = (img2d, loc2d,
            w_img, w_loc, ba,
            bf16(params["w12"]), params["b12"],
            w22g, b22m,
            params["gamma"], params["beta"],
            bf16(params["w3"]), params["b3"])

    def full_spec(arr):
        nd = arr.ndim
        return pl.BlockSpec(arr.shape, lambda i, _nd=nd: (0,) * _nd)

    in_specs = ([pl.BlockSpec((tm_eff, inplanes), lambda i: (i, 0)),
                 pl.BlockSpec((tm_eff, loc_planes), lambda i: (i, 0))]
                + [full_spec(a) for a in args[2:]])

    out = pl.pallas_call(
        partial(dynamic_mlp_c_kernel, inplanes=inplanes, planes=planes,
                group=group, eps=eps),
        grid=(num_tiles,),
        out_shape=jax.ShapeDtypeStruct((M, planes), jnp.float32),
        in_specs=in_specs,
        out_specs=pl.BlockSpec((tm_eff, planes), lambda i: (i, 0)),
        compiler_params=pltpu.CompilerParams(
            dimension_semantics=("parallel",),
            vmem_limit_bytes=vmem_limit_bytes,
        ),
    )(*args)
    return out.reshape(B, N, planes)


def init_params(key, inplanes, planes, loc_planes):
    ks = jax.random.split(key, 10)
    cin = inplanes + loc_planes
    f32 = jnp.float32

    def lin(k, fan_in, fan_out):
        return 0.1 * jax.random.normal(k, (fan_in, fan_out), dtype=f32)

    return {
        "w11": lin(ks[0], cin, inplanes),
        "b11": 0.1 * jax.random.normal(ks[1], (1, inplanes), dtype=f32),
        "w12": lin(ks[2], inplanes, inplanes),
        "b12": 0.1 * jax.random.normal(ks[3], (1, inplanes), dtype=f32),
        "w21": lin(ks[4], cin, inplanes),
        "b21": 0.1 * jax.random.normal(ks[5], (1, inplanes), dtype=f32),
        "w22": lin(ks[6], inplanes, inplanes * planes),
        "b22": 0.1 * jax.random.normal(ks[7], (1, inplanes * planes), dtype=f32),
        "gamma": jnp.ones((1, planes), dtype=f32),      # LayerNorm default init
        "beta": jnp.zeros((1, planes), dtype=f32),
        "w3": lin(ks[8], planes, planes),
        "b3": 0.1 * jax.random.normal(ks[9], (1, planes), dtype=f32),
    }


def reference_forward(img_fea, loc_fea, p, *, inplanes, planes, eps=1e-5,
                      matmul_dtype=jnp.float32):
    """Pure-JAX reference mirroring the PyTorch module.

    matmul_dtype=float32  -> faithful f32 PyTorch semantics.
    matmul_dtype=bfloat16 -> bf16-operand / f32-accumulate GEMMs, close to the
                             kernel's numerics.
    """
    B, N, _ = img_fea.shape

    def mm(x, w):
        return jnp.dot(x.astype(matmul_dtype), w.astype(matmul_dtype),
                       preferred_element_type=jnp.float32)

    cat = jnp.concatenate([img_fea, loc_fea], axis=2)
    h11 = jnp.maximum(mm(cat, p["w11"]) + p["b11"], 0.0)
    w12v = mm(h11, p["w12"]) + p["b12"]
    h21 = jnp.maximum(mm(cat, p["w21"]) + p["b21"], 0.0)
    w22v = (mm(h21, p["w22"]) + p["b22"]).reshape(B, N, inplanes, planes)
    fused = jnp.squeeze(jnp.matmul(w12v[:, :, None, :].astype(jnp.float32),
                                   w22v.astype(jnp.float32)), axis=2)
    mean = jnp.mean(fused, axis=-1, keepdims=True)
    var = jnp.mean(jnp.square(fused - mean), axis=-1, keepdims=True)
    normed = (fused - mean) / jnp.sqrt(var + eps) * p["gamma"] + p["beta"]
    act = jnp.maximum(normed, 0.0)
    return mm(act, p["w3"]) + p["b3"]


if __name__ == "__main__":
    inplanes, loc_planes, planes = 32, 16, 128
    key = jax.random.PRNGKey(0)
    k_img, k_loc, k_par = jax.random.split(key, 3)
    params = init_params(k_par, inplanes, planes, loc_planes)

    # Case 1: tiny shape (splits into 2 tiles of 8 rows for the >=2-tile rule).
    B, N = 2, 8
    img_fea = jax.random.normal(k_img, (B, N, inplanes), dtype=jnp.float32)
    loc_fea = jax.random.normal(k_loc, (B, N, loc_planes), dtype=jnp.float32)

    out = dynamic_mlp_c(img_fea, loc_fea, params, inplanes=inplanes,
                        planes=planes)
    out = jax.block_until_ready(out)
    assert out.shape == (B, N, planes)

    ref_bf16 = reference_forward(img_fea, loc_fea, params, inplanes=inplanes,
                                 planes=planes, matmul_dtype=jnp.bfloat16)
    ref_f32 = reference_forward(img_fea, loc_fea, params, inplanes=inplanes,
                                planes=planes, matmul_dtype=jnp.float32)
    assert jnp.allclose(out, ref_bf16, rtol=2e-2, atol=2e-2), \
        "mismatch vs bf16-matmul reference"
    assert jnp.allclose(out, ref_f32, rtol=1e-1, atol=1e-1), \
        "mismatch vs f32 reference"

    # Case 2: multi-tile grid with a ragged last block (M=600, tile=128 -> 5
    # tiles, last one 88 valid rows) — exercises the unpadded pipeline path.
    B2, N2 = 2, 300
    img2 = jax.random.normal(jax.random.PRNGKey(1), (B2, N2, inplanes),
                             dtype=jnp.float32)
    loc2 = jax.random.normal(jax.random.PRNGKey(2), (B2, N2, loc_planes),
                             dtype=jnp.float32)
    out2 = dynamic_mlp_c(img2, loc2, params, inplanes=inplanes, planes=planes,
                         tm=128)
    out2 = jax.block_until_ready(out2)
    ref2 = reference_forward(img2, loc2, params, inplanes=inplanes,
                             planes=planes, matmul_dtype=jnp.bfloat16)
    assert out2.shape == (B2, N2, planes)
    assert jnp.allclose(out2, ref2, rtol=2e-2, atol=2e-2), \
        "multi-tile mismatch vs bf16-matmul reference"

    print("KERNEL_OK")
</pallas_src>

<mosaic_0001>
module attributes {stable_mosaic.version = 11 : i64} {
  func.func @dynamic_mlp_c_kernel(%arg0: i32, %arg1: memref<8x32xf32, #tpu.memory_space<vmem>>, %arg2: memref<8x16xf32, #tpu.memory_space<vmem>>, %arg3: memref<32x64xbf16, #tpu.memory_space<vmem>>, %arg4: memref<16x64xbf16, #tpu.memory_space<vmem>>, %arg5: memref<1x64xf32, #tpu.memory_space<vmem>>, %arg6: memref<32x32xbf16, #tpu.memory_space<vmem>>, %arg7: memref<1x32xf32, #tpu.memory_space<vmem>>, %arg8: memref<4x256x128xbf16, #tpu.memory_space<vmem>>, %arg9: memref<32x128xbf16, #tpu.memory_space<vmem>>, %arg10: memref<1x128xf32, #tpu.memory_space<vmem>>, %arg11: memref<1x128xf32, #tpu.memory_space<vmem>>, %arg12: memref<128x128xbf16, #tpu.memory_space<vmem>>, %arg13: memref<1x128xf32, #tpu.memory_space<vmem>>, %arg14: memref<8x128xf32, #tpu.memory_space<vmem>>) attributes {dimension_semantics = [#tpu.dimension_semantics<parallel>], iteration_bounds = array<i64: 2>, scalar_prefetch = 0 : i64, scratch_operands = 0 : i64, tpu.core_type = #tpu.core_type<tc>, window_params = [{transform_indices = @transform_0, window_bounds = array<i64: 8, 32>}, {transform_indices = @transform_1, window_bounds = array<i64: 8, 16>}, {pipeline_mode = #tpu.pipeline_mode<synchronous>, transform_indices = @transform_2, window_bounds = array<i64: 32, 64>}, {pipeline_mode = #tpu.pipeline_mode<synchronous>, transform_indices = @transform_3, window_bounds = array<i64: 16, 64>}, {pipeline_mode = #tpu.pipeline_mode<synchronous>, transform_indices = @transform_4, window_bounds = array<i64: 1, 64>}, {pipeline_mode = #tpu.pipeline_mode<synchronous>, transform_indices = @transform_5, window_bounds = array<i64: 32, 32>}, {pipeline_mode = #tpu.pipeline_mode<synchronous>, transform_indices = @transform_6, window_bounds = array<i64: 1, 32>}, {pipeline_mode = #tpu.pipeline_mode<synchronous>, transform_indices = @transform_7, window_bounds = array<i64: 4, 256, 128>}, {pipeline_mode = #tpu.pipeline_mode<synchronous>, transform_indices = @transform_8, window_bounds = array<i64: 32, 128>}, {pipeline_mode = #tpu.pipeline_mode<synchronous>, transform_indices = @transform_9, window_bounds = array<i64: 1, 128>}, {pipeline_mode = #tpu.pipeline_mode<synchronous>, transform_indices = @transform_10, window_bounds = array<i64: 1, 128>}, {pipeline_mode = #tpu.pipeline_mode<synchronous>, transform_indices = @transform_11, window_bounds = array<i64: 128, 128>}, {pipeline_mode = #tpu.pipeline_mode<synchronous>, transform_indices = @transform_12, window_bounds = array<i64: 1, 128>}, {transform_indices = @transform_13, window_bounds = array<i64: 8, 128>}]} {
    %c0 = arith.constant 0 : index
    %c0_0 = arith.constant 0 : index
    %0 = vector.load %arg1[%c0, %c0_0] : memref<8x32xf32, #tpu.memory_space<vmem>>, vector<8x32xf32>
    %1 = arith.truncf %0 : vector<8x32xf32> to vector<8x32xbf16>
    %c0_1 = arith.constant 0 : index
    %c0_2 = arith.constant 0 : index
    %2 = vector.load %arg2[%c0_1, %c0_2] : memref<8x16xf32, #tpu.memory_space<vmem>>, vector<8x16xf32>
    %3 = arith.truncf %2 : vector<8x16xf32> to vector<8x16xbf16>
    %c0_3 = arith.constant 0 : index
    %c0_4 = arith.constant 0 : index
    %4 = vector.load %arg3[%c0_3, %c0_4] : memref<32x64xbf16, #tpu.memory_space<vmem>>, vector<32x64xbf16>
    %cst = arith.constant dense<0.000000e+00> : vector<8x64xf32>
    %5 = tpu.matmul %1, %4, %cst {dimension_numbers = #tpu.dot_dimension_numbers<[1], [0], [0], [1], [0, 0, 1, 1], [], []>} : vector<8x32xbf16>, vector<32x64xbf16>, vector<8x64xf32> -> vector<8x64xf32>
    %c0_5 = arith.constant 0 : index
    %c0_6 = arith.constant 0 : index
    %6 = vector.load %arg4[%c0_5, %c0_6] : memref<16x64xbf16, #tpu.memory_space<vmem>>, vector<16x64xbf16>
    %cst_7 = arith.constant dense<0.000000e+00> : vector<8x64xf32>
    %7 = tpu.matmul %3, %6, %cst_7 {dimension_numbers = #tpu.dot_dimension_numbers<[1], [0], [0], [1], [0, 0, 1, 1], [], []>} : vector<8x16xbf16>, vector<16x64xbf16>, vector<8x64xf32> -> vector<8x64xf32>
    %8 = arith.addf %5, %7 : vector<8x64xf32>
    %c0_8 = arith.constant 0 : index
    %c0_9 = arith.constant 0 : index
    %9 = vector.load %arg5[%c0_8, %c0_9] : memref<1x64xf32, #tpu.memory_space<vmem>>, vector<1x64xf32>
    %10 = vector.broadcast %9 : vector<1x64xf32> to vector<8x64xf32>
    %11 = arith.addf %8, %10 : vector<8x64xf32>
    %cst_10 = arith.constant 0.000000e+00 : f32
    %12 = vector.broadcast %cst_10 : f32 to vector<8x64xf32>
    %13 = arith.maximumf %11, %12 : vector<8x64xf32>
    %14 = vector.extract_strided_slice %13 {offsets = [0, 0], sizes = [8, 32], strides = [1, 1]} : vector<8x64xf32> to vector<8x32xf32>
    %15 = arith.truncf %14 : vector<8x32xf32> to vector<8x32xbf16>
    %16 = vector.extract_strided_slice %13 {offsets = [0, 32], sizes = [8, 32], strides = [1, 1]} : vector<8x64xf32> to vector<8x32xf32>
    %c0_11 = arith.constant 0 : index
    %c0_12 = arith.constant 0 : index
    %17 = vector.load %arg6[%c0_11, %c0_12] : memref<32x32xbf16, #tpu.memory_space<vmem>>, vector<32x32xbf16>
    %cst_13 = arith.constant dense<0.000000e+00> : vector<8x32xf32>
    %18 = tpu.matmul %15, %17, %cst_13 {dimension_numbers = #tpu.dot_dimension_numbers<[1], [0], [0], [1], [0, 0, 1, 1], [], []>} : vector<8x32xbf16>, vector<32x32xbf16>, vector<8x32xf32> -> vector<8x32xf32>
    %c0_14 = arith.constant 0 : index
    %c0_15 = arith.constant 0 : index
    %19 = vector.load %arg7[%c0_14, %c0_15] : memref<1x32xf32, #tpu.memory_space<vmem>>, vector<1x32xf32>
    %20 = vector.broadcast %19 : vector<1x32xf32> to vector<8x32xf32>
    %21 = arith.addf %18, %20 : vector<8x32xf32>
    %22 = arith.truncf %21 : vector<8x32xf32> to vector<8x32xbf16>
    %c0_16 = arith.constant 0 : index
    %c0_17 = arith.constant 0 : index
    %23 = vector.load %arg9[%c0_16, %c0_17] : memref<32x128xbf16, #tpu.memory_space<vmem>>, vector<32x128xbf16>
    %cst_18 = arith.constant dense<0.000000e+00> : vector<8x128xf32>
    %24 = tpu.matmul %22, %23, %cst_18 {dimension_numbers = #tpu.dot_dimension_numbers<[1], [0], [0], [1], [0, 0, 1, 1], [], []>} : vector<8x32xbf16>, vector<32x128xbf16>, vector<8x128xf32> -> vector<8x128xf32>
    %25 = vector.extract_strided_slice %21 {offsets = [0, 0], sizes = [8, 1], strides = [1, 1]} : vector<8x32xf32> to vector<8x1xf32>
    %26 = vector.broadcast %25 : vector<8x1xf32> to vector<8x32xf32>
    %27 = arith.mulf %26, %16 : vector<8x32xf32>
    %28 = arith.truncf %27 : vector<8x32xf32> to vector<8x32xbf16>
    %29 = vector.extract_strided_slice %21 {offsets = [0, 1], sizes = [8, 1], strides = [1, 1]} : vector<8x32xf32> to vector<8x1xf32>
    %30 = vector.broadcast %29 : vector<8x1xf32> to vector<8x32xf32>
    %31 = arith.mulf %30, %16 : vector<8x32xf32>
    %32 = arith.truncf %31 : vector<8x32xf32> to vector<8x32xbf16>
    %33 = vector.extract_strided_slice %21 {offsets = [0, 2], sizes = [8, 1], strides = [1, 1]} : vector<8x32xf32> to vector<8x1xf32>
    %34 = vector.broadcast %33 : vector<8x1xf32> to vector<8x32xf32>
    %35 = arith.mulf %34, %16 : vector<8x32xf32>
    %36 = arith.truncf %35 : vector<8x32xf32> to vector<8x32xbf16>
    %37 = vector.extract_strided_slice %21 {offsets = [0, 3], sizes = [8, 1], strides = [1, 1]} : vector<8x32xf32> to vector<8x1xf32>
    %38 = vector.broadcast %37 : vector<8x1xf32> to vector<8x32xf32>
    %39 = arith.mulf %38, %16 : vector<8x32xf32>
    %40 = arith.truncf %39 : vector<8x32xf32> to vector<8x32xbf16>
    %41 = vector.extract_strided_slice %21 {offsets = [0, 4], sizes = [8, 1], strides = [1, 1]} : vector<8x32xf32> to vector<8x1xf32>
    %42 = vector.broadcast %41 : vector<8x1xf32> to vector<8x32xf32>
    %43 = arith.mulf %42, %16 : vector<8x32xf32>
    %44 = arith.truncf %43 : vector<8x32xf32> to vector<8x32xbf16>
    %45 = vector.extract_strided_slice %21 {offsets = [0, 5], sizes = [8, 1], strides = [1, 1]} : vector<8x32xf32> to vector<8x1xf32>
    %46 = vector.broadcast %45 : vector<8x1xf32> to vector<8x32xf32>
    %47 = arith.mulf %46, %16 : vector<8x32xf32>
    %48 = arith.truncf %47 : vector<8x32xf32> to vector<8x32xbf16>
    %49 = vector.extract_strided_slice %21 {offsets = [0, 6], sizes = [8, 1], strides = [1, 1]} : vector<8x32xf32> to vector<8x1xf32>
    %50 = vector.broadcast %49 : vector<8x1xf32> to vector<8x32xf32>
    %51 = arith.mulf %50, %16 : vector<8x32xf32>
    %52 = arith.truncf %51 : vector<8x32xf32> to vector<8x32xbf16>
    %53 = vector.extract_strided_slice %21 {offsets = [0, 7], sizes = [8, 1], strides = [1, 1]} : vector<8x32xf32> to vector<8x1xf32>
    %54 = vector.broadcast %53 : vector<8x1xf32> to vector<8x32xf32>
    %55 = arith.mulf %54, %16 : vector<8x32xf32>
    %56 = arith.truncf %55 : vector<8x32xf32> to vector<8x32xbf16>
    %57 = tpu.concatenate %28, %32, %36, %40, %44, %48, %52, %56 in 1 : vector<8x32xbf16>, vector<8x32xbf16>, vector<8x32xbf16>, vector<8x32xbf16>, vector<8x32xbf16>, vector<8x32xbf16>, vector<8x32xbf16>, vector<8x32xbf16> -> vector<8x256xbf16>
    %c0_19 = arith.constant 0 : index
    %c0_20 = arith.constant 0 : index
    %c0_21 = arith.constant 0 : index
    %58 = vector.load %arg8[%c0_19, %c0_20, %c0_21] : memref<4x256x128xbf16, #tpu.memory_space<vmem>>, vector<1x256x128xbf16>
    %59 = vector.shape_cast %58 : vector<1x256x128xbf16> to vector<256x128xbf16>
    %cst_22 = arith.constant dense<0.000000e+00> : vector<8x128xf32>
    %60 = tpu.matmul %57, %59, %cst_22 {dimension_numbers = #tpu.dot_dimension_numbers<[1], [0], [0], [1], [0, 0, 1, 1], [], []>} : vector<8x256xbf16>, vector<256x128xbf16>, vector<8x128xf32> -> vector<8x128xf32>
    %61 = arith.addf %24, %60 : vector<8x128xf32>
    %62 = vector.extract_strided_slice %21 {offsets = [0, 8], sizes = [8, 1], strides = [1, 1]} : vector<8x32xf32> to vector<8x1xf32>
    %63 = vector.broadcast %62 : vector<8x1xf32> to vector<8x32xf32>
    %64 = arith.mulf %63, %16 : vector<8x32xf32>
    %65 = arith.truncf %64 : vector<8x32xf32> to vector<8x32xbf16>
    %66 = vector.extract_strided_slice %21 {offsets = [0, 9], sizes = [8, 1], strides = [1, 1]} : vector<8x32xf32> to vector<8x1xf32>
    %67 = vector.broadcast %66 : vector<8x1xf32> to vector<8x32xf32>
    %68 = arith.mulf %67, %16 : vector<8x32xf32>
    %69 = arith.truncf %68 : vector<8x32xf32> to vector<8x32xbf16>
    %70 = vector.extract_strided_slice %21 {offsets = [0, 10], sizes = [8, 1], strides = [1, 1]} : vector<8x32xf32> to vector<8x1xf32>
    %71 = vector.broadcast %70 : vector<8x1xf32> to vector<8x32xf32>
    %72 = arith.mulf %71, %16 : vector<8x32xf32>
    %73 = arith.truncf %72 : vector<8x32xf32> to vector<8x32xbf16>
    %74 = vector.extract_strided_slice %21 {offsets = [0, 11], sizes = [8, 1], strides = [1, 1]} : vector<8x32xf32> to vector<8x1xf32>
    %75 = vector.broadcast %74 : vector<8x1xf32> to vector<8x32xf32>
    %76 = arith.mulf %75, %16 : vector<8x32xf32>
    %77 = arith.truncf %76 : vector<8x32xf32> to vector<8x32xbf16>
    %78 = vector.extract_strided_slice %21 {offsets = [0, 12], sizes = [8, 1], strides = [1, 1]} : vector<8x32xf32> to vector<8x1xf32>
    %79 = vector.broadcast %78 : vector<8x1xf32> to vector<8x32xf32>
    %80 = arith.mulf %79, %16 : vector<8x32xf32>
    %81 = arith.truncf %80 : vector<8x32xf32> to vector<8x32xbf16>
    %82 = vector.extract_strided_slice %21 {offsets = [0, 13], sizes = [8, 1], strides = [1, 1]} : vector<8x32xf32> to vector<8x1xf32>
    %83 = vector.broadcast %82 : vector<8x1xf32> to vector<8x32xf32>
    %84 = arith.mulf %83, %16 : vector<8x32xf32>
    %85 = arith.truncf %84 : vector<8x32xf32> to vector<8x32xbf16>
    %86 = vector.extract_strided_slice %21 {offsets = [0, 14], sizes = [8, 1], strides = [1, 1]} : vector<8x32xf32> to vector<8x1xf32>
    %87 = vector.broadcast %86 : vector<8x1xf32> to vector<8x32xf32>
    %88 = arith.mulf %87, %16 : vector<8x32xf32>
    %89 = arith.truncf %88 : vector<8x32xf32> to vector<8x32xbf16>
    %90 = vector.extract_strided_slice %21 {offsets = [0, 15], sizes = [8, 1], strides = [1, 1]} : vector<8x32xf32> to vector<8x1xf32>
    %91 = vector.broadcast %90 : vector<8x1xf32> to vector<8x32xf32>
    %92 = arith.mulf %91, %16 : vector<8x32xf32>
    %93 = arith.truncf %92 : vector<8x32xf32> to vector<8x32xbf16>
    %94 = tpu.concatenate %65, %69, %73, %77, %81, %85, %89, %93 in 1 : vector<8x32xbf16>, vector<8x32xbf16>, vector<8x32xbf16>, vector<8x32xbf16>, vector<8x32xbf16>, vector<8x32xbf16>, vector<8x32xbf16>, vector<8x32xbf16> -> vector<8x256xbf16>
    %c1 = arith.constant 1 : index
    %c0_23 = arith.constant 0 : index
    %c0_24 = arith.constant 0 : index
    %95 = vector.load %arg8[%c1, %c0_23, %c0_24] : memref<4x256x128xbf16, #tpu.memory_space<vmem>>, vector<1x256x128xbf16>
    %96 = vector.shape_cast %95 : vector<1x256x128xbf16> to vector<256x128xbf16>
    %cst_25 = arith.constant dense<0.000000e+00> : vector<8x128xf32>
    %97 = tpu.matmul %94, %96, %cst_25 {dimension_numbers = #tpu.dot_dimension_numbers<[1], [0], [0], [1], [0, 0, 1, 1], [], []>} : vector<8x256xbf16>, vector<256x128xbf16>, vector<8x128xf32> -> vector<8x128xf32>
    %98 = arith.addf %61, %97 : vector<8x128xf32>
    %99 = vector.extract_strided_slice %21 {offsets = [0, 16], sizes = [8, 1], strides = [1, 1]} : vector<8x32xf32> to vector<8x1xf32>
    %100 = vector.broadcast %99 : vector<8x1xf32> to vector<8x32xf32>
    %101 = arith.mulf %100, %16 : vector<8x32xf32>
    %102 = arith.truncf %101 : vector<8x32xf32> to vector<8x32xbf16>
    %103 = vector.extract_strided_slice %21 {offsets = [0, 17], sizes = [8, 1], strides = [1, 1]} : vector<8x32xf32> to vector<8x1xf32>
    %104 = vector.broadcast %103 : vector<8x1xf32> to vector<8x32xf32>
    %105 = arith.mulf %104, %16 : vector<8x32xf32>
    %106 = arith.truncf %105 : vector<8x32xf32> to vector<8x32xbf16>
    %107 = vector.extract_strided_slice %21 {offsets = [0, 18], sizes = [8, 1], strides = [1, 1]} : vector<8x32xf32> to vector<8x1xf32>
    %108 = vector.broadcast %107 : vector<8x1xf32> to vector<8x32xf32>
    %109 = arith.mulf %108, %16 : vector<8x32xf32>
    %110 = arith.truncf %109 : vector<8x32xf32> to vector<8x32xbf16>
    %111 = vector.extract_strided_slice %21 {offsets = [0, 19], sizes = [8, 1], strides = [1, 1]} : vector<8x32xf32> to vector<8x1xf32>
    %112 = vector.broadcast %111 : vector<8x1xf32> to vector<8x32xf32>
    %113 = arith.mulf %112, %16 : vector<8x32xf32>
    %114 = arith.truncf %113 : vector<8x32xf32> to vector<8x32xbf16>
    %115 = vector.extract_strided_slice %21 {offsets = [0, 20], sizes = [8, 1], strides = [1, 1]} : vector<8x32xf32> to vector<8x1xf32>
    %116 = vector.broadcast %115 : vector<8x1xf32> to vector<8x32xf32>
    %117 = arith.mulf %116, %16 : vector<8x32xf32>
    %118 = arith.truncf %117 : vector<8x32xf32> to vector<8x32xbf16>
    %119 = vector.extract_strided_slice %21 {offsets = [0, 21], sizes = [8, 1], strides = [1, 1]} : vector<8x32xf32> to vector<8x1xf32>
    %120 = vector.broadcast %119 : vector<8x1xf32> to vector<8x32xf32>
    %121 = arith.mulf %120, %16 : vector<8x32xf32>
    %122 = arith.truncf %121 : vector<8x32xf32> to vector<8x32xbf16>
    %123 = vector.extract_strided_slice %21 {offsets = [0, 22], sizes = [8, 1], strides = [1, 1]} : vector<8x32xf32> to vector<8x1xf32>
    %124 = vector.broadcast %123 : vector<8x1xf32> to vector<8x32xf32>
    %125 = arith.mulf %124, %16 : vector<8x32xf32>
    %126 = arith.truncf %125 : vector<8x32xf32> to vector<8x32xbf16>
    %127 = vector.extract_strided_slice %21 {offsets = [0, 23], sizes = [8, 1], strides = [1, 1]} : vector<8x32xf32> to vector<8x1xf32>
    %128 = vector.broadcast %127 : vector<8x1xf32> to vector<8x32xf32>
    %129 = arith.mulf %128, %16 : vector<8x32xf32>
    %130 = arith.truncf %129 : vector<8x32xf32> to vector<8x32xbf16>
    %131 = tpu.concatenate %102, %106, %110, %114, %118, %122, %126, %130 in 1 : vector<8x32xbf16>, vector<8x32xbf16>, vector<8x32xbf16>, vector<8x32xbf16>, vector<8x32xbf16>, vector<8x32xbf16>, vector<8x32xbf16>, vector<8x32xbf16> -> vector<8x256xbf16>
    %c2 = arith.constant 2 : index
    %c0_26 = arith.constant 0 : index
    %c0_27 = arith.constant 0 : index
    %132 = vector.load %arg8[%c2, %c0_26, %c0_27] : memref<4x256x128xbf16, #tpu.memory_space<vmem>>, vector<1x256x128xbf16>
    %133 = vector.shape_cast %132 : vector<1x256x128xbf16> to vector<256x128xbf16>
    %cst_28 = arith.constant dense<0.000000e+00> : vector<8x128xf32>
    %134 = tpu.matmul %131, %133, %cst_28 {dimension_numbers = #tpu.dot_dimension_numbers<[1], [0], [0], [1], [0, 0, 1, 1], [], []>} : vector<8x256xbf16>, vector<256x128xbf16>, vector<8x128xf32> -> vector<8x128xf32>
    %135 = arith.addf %98, %134 : vector<8x128xf32>
    %136 = vector.extract_strided_slice %21 {offsets = [0, 24], sizes = [8, 1], strides = [1, 1]} : vector<8x32xf32> to vector<8x1xf32>
    %137 = vector.broadcast %136 : vector<8x1xf32> to vector<8x32xf32>
    %138 = arith.mulf %137, %16 : vector<8x32xf32>
    %139 = arith.truncf %138 : vector<8x32xf32> to vector<8x32xbf16>
    %140 = vector.extract_strided_slice %21 {offsets = [0, 25], sizes = [8, 1], strides = [1, 1]} : vector<8x32xf32> to vector<8x1xf32>
    %141 = vector.broadcast %140 : vector<8x1xf32> to vector<8x32xf32>
    %142 = arith.mulf %141, %16 : vector<8x32xf32>
    %143 = arith.truncf %142 : vector<8x32xf32> to vector<8x32xbf16>
    %144 = vector.extract_strided_slice %21 {offsets = [0, 26], sizes = [8, 1], strides = [1, 1]} : vector<8x32xf32> to vector<8x1xf32>
    %145 = vector.broadcast %144 : vector<8x1xf32> to vector<8x32xf32>
    %146 = arith.mulf %145, %16 : vector<8x32xf32>
    %147 = arith.truncf %146 : vector<8x32xf32> to vector<8x32xbf16>
    %148 = vector.extract_strided_slice %21 {offsets = [0, 27], sizes = [8, 1], strides = [1, 1]} : vector<8x32xf32> to vector<8x1xf32>
    %149 = vector.broadcast %148 : vector<8x1xf32> to vector<8x32xf32>
    %150 = arith.mulf %149, %16 : vector<8x32xf32>
    %151 = arith.truncf %150 : vector<8x32xf32> to vector<8x32xbf16>
    %152 = vector.extract_strided_slice %21 {offsets = [0, 28], sizes = [8, 1], strides = [1, 1]} : vector<8x32xf32> to vector<8x1xf32>
    %153 = vector.broadcast %152 : vector<8x1xf32> to vector<8x32xf32>
    %154 = arith.mulf %153, %16 : vector<8x32xf32>
    %155 = arith.truncf %154 : vector<8x32xf32> to vector<8x32xbf16>
    %156 = vector.extract_strided_slice %21 {offsets = [0, 29], sizes = [8, 1], strides = [1, 1]} : vector<8x32xf32> to vector<8x1xf32>
    %157 = vector.broadcast %156 : vector<8x1xf32> to vector<8x32xf32>
    %158 = arith.mulf %157, %16 : vector<8x32xf32>
    %159 = arith.truncf %158 : vector<8x32xf32> to vector<8x32xbf16>
    %160 = vector.extract_strided_slice %21 {offsets = [0, 30], sizes = [8, 1], strides = [1, 1]} : vector<8x32xf32> to vector<8x1xf32>
    %161 = vector.broadcast %160 : vector<8x1xf32> to vector<8x32xf32>
    %162 = arith.mulf %161, %16 : vector<8x32xf32>
    %163 = arith.truncf %162 : vector<8x32xf32> to vector<8x32xbf16>
    %164 = vector.extract_strided_slice %21 {offsets = [0, 31], sizes = [8, 1], strides = [1, 1]} : vector<8x32xf32> to vector<8x1xf32>
    %165 = vector.broadcast %164 : vector<8x1xf32> to vector<8x32xf32>
    %166 = arith.mulf %165, %16 : vector<8x32xf32>
    %167 = arith.truncf %166 : vector<8x32xf32> to vector<8x32xbf16>
    %168 = tpu.concatenate %139, %143, %147, %151, %155, %159, %163, %167 in 1 : vector<8x32xbf16>, vector<8x32xbf16>, vector<8x32xbf16>, vector<8x32xbf16>, vector<8x32xbf16>, vector<8x32xbf16>, vector<8x32xbf16>, vector<8x32xbf16> -> vector<8x256xbf16>
    %c3 = arith.constant 3 : index
    %c0_29 = arith.constant 0 : index
    %c0_30 = arith.constant 0 : index
    %169 = vector.load %arg8[%c3, %c0_29, %c0_30] : memref<4x256x128xbf16, #tpu.memory_space<vmem>>, vector<1x256x128xbf16>
    %170 = vector.shape_cast %169 : vector<1x256x128xbf16> to vector<256x128xbf16>
    %cst_31 = arith.constant dense<0.000000e+00> : vector<8x128xf32>
    %171 = tpu.matmul %168, %170, %cst_31 {dimension_numbers = #tpu.dot_dimension_numbers<[1], [0], [0], [1], [0, 0, 1, 1], [], []>} : vector<8x256xbf16>, vector<256x128xbf16>, vector<8x128xf32> -> vector<8x128xf32>
    %172 = arith.addf %135, %171 : vector<8x128xf32>
    %cst_32 = arith.constant dense<0.000000e+00> : vector<8xf32>
    %173 = vector.multi_reduction <add>, %172, %cst_32 [1] : vector<8x128xf32> to vector<8xf32>
    %174 = vector.shape_cast %173 : vector<8xf32> to vector<8x1xf32>
    %cst_33 = arith.constant 1.280000e+02 : f32
    %175 = vector.broadcast %cst_33 : f32 to vector<8x1xf32>
    %176 = arith.divf %174, %175 : vector<8x1xf32>
    %177 = vector.broadcast %176 : vector<8x1xf32> to vector<8x128xf32>
    %178 = arith.subf %172, %177 : vector<8x128xf32>
    %179 = arith.mulf %178, %178 : vector<8x128xf32>
    %cst_34 = arith.constant dense<0.000000e+00> : vector<8xf32>
    %180 = vector.multi_reduction <add>, %179, %cst_34 [1] : vector<8x128xf32> to vector<8xf32>
    %181 = vector.shape_cast %180 : vector<8xf32> to vector<8x1xf32>
    %cst_35 = arith.constant 1.280000e+02 : f32
    %182 = vector.broadcast %cst_35 : f32 to vector<8x1xf32>
    %183 = arith.divf %181, %182 : vector<8x1xf32>
    %cst_36 = arith.constant 9.99999974E-6 : f32
    %184 = vector.broadcast %cst_36 : f32 to vector<8x1xf32>
    %185 = arith.addf %183, %184 : vector<8x1xf32>
    %186 = math.rsqrt %185 : vector<8x1xf32>
    %c0_37 = arith.constant 0 : index
    %c0_38 = arith.constant 0 : index
    %187 = vector.load %arg10[%c0_37, %c0_38] : memref<1x128xf32, #tpu.memory_space<vmem>>, vector<1x128xf32>
    %188 = vector.broadcast %186 : vector<8x1xf32> to vector<8x128xf32>
    %189 = vector.broadcast %187 : vector<1x128xf32> to vector<8x128xf32>
    %190 = arith.mulf %188, %189 : vector<8x128xf32>
    %191 = arith.mulf %178, %190 : vector<8x128xf32>
    %c0_39 = arith.constant 0 : index
    %c0_40 = arith.constant 0 : index
    %192 = vector.load %arg11[%c0_39, %c0_40] : memref<1x128xf32, #tpu.memory_space<vmem>>, vector<1x128xf32>
    %193 = vector.broadcast %192 : vector<1x128xf32> to vector<8x128xf32>
    %194 = arith.addf %191, %193 : vector<8x128xf32>
    %cst_41 = arith.constant 0.000000e+00 : f32
    %195 = vector.broadcast %cst_41 : f32 to vector<8x128xf32>
    %196 = arith.maximumf %194, %195 : vector<8x128xf32>
    %197 = arith.truncf %196 : vector<8x128xf32> to vector<8x128xbf16>
    %c0_42 = arith.constant 0 : index
    %c0_43 = arith.constant 0 : index
    %198 = vector.load %arg12[%c0_42, %c0_43] : memref<128x128xbf16, #tpu.memory_space<vmem>>, vector<128x128xbf16>
    %cst_44 = arith.constant dense<0.000000e+00> : vector<8x128xf32>
    %199 = tpu.matmul %197, %198, %cst_44 {dimension_numbers = #tpu.dot_dimension_numbers<[1], [0], [0], [1], [0, 0, 1, 1], [], []>} : vector<8x128xbf16>, vector<128x128xbf16>, vector<8x128xf32> -> vector<8x128xf32>
    %c0_45 = arith.constant 0 : index
    %c0_46 = arith.constant 0 : index
    %200 = vector.load %arg13[%c0_45, %c0_46] : memref<1x128xf32, #tpu.memory_space<vmem>>, vector<1x128xf32>
    %201 = vector.broadcast %200 : vector<1x128xf32> to vector<8x128xf32>
    %202 = arith.addf %199, %201 : vector<8x128xf32>
    %c0_47 = arith.constant 0 : index
    %c0_48 = arith.constant 0 : index
    %203 = vector.load %arg14[%c0_47, %c0_48] : memref<8x128xf32, #tpu.memory_space<vmem>>, vector<8x128xf32>
    tpu.vector_store %arg14[%c0_47, %c0_48], %202 {strides = array<i32>} : memref<8x128xf32, #tpu.memory_space<vmem>>, vector<8x128xf32>,
    return
  }
  func.func @transform_0(%arg0: i32) -> (i32, i32) {
    %c0_i32 = arith.constant 0 : i32
    %c0_i32_0 = arith.constant 0 : i32
    return %arg0, %c0_i32 : i32, i32
  }
  func.func @transform_1(%arg0: i32) -> (i32, i32) {
    %c0_i32 = arith.constant 0 : i32
    %c0_i32_0 = arith.constant 0 : i32
    return %arg0, %c0_i32 : i32, i32
  }
  func.func @transform_2(%arg0: i32) -> (i32, i32) {
    %c0_i32 = arith.constant 0 : i32
    %c0_i32_0 = arith.constant 0 : i32
    %c0_i32_1 = arith.constant 0 : i32
    return %c0_i32, %c0_i32_0 : i32, i32
  }
  func.func @transform_3(%arg0: i32) -> (i32, i32) {
    %c0_i32 = arith.constant 0 : i32
    %c0_i32_0 = arith.constant 0 : i32
    %c0_i32_1 = arith.constant 0 : i32
    return %c0_i32, %c0_i32_0 : i32, i32
  }
  func.func @transform_4(%arg0: i32) -> (i32, i32) {
    %c0_i32 = arith.constant 0 : i32
    %c0_i32_0 = arith.constant 0 : i32
    %c0_i32_1 = arith.constant 0 : i32
    return %c0_i32, %c0_i32_0 : i32, i32
  }
  func.func @transform_5(%arg0: i32) -> (i32, i32) {
    %c0_i32 = arith.constant 0 : i32
    %c0_i32_0 = arith.constant 0 : i32
    %c0_i32_1 = arith.constant 0 : i32
    return %c0_i32, %c0_i32_0 : i32, i32
  }
  func.func @transform_6(%arg0: i32) -> (i32, i32) {
    %c0_i32 = arith.constant 0 : i32
    %c0_i32_0 = arith.constant 0 : i32
    %c0_i32_1 = arith.constant 0 : i32
    return %c0_i32, %c0_i32_0 : i32, i32
  }
  func.func @transform_7(%arg0: i32) -> (i32, i32, i32) {
    %c0_i32 = arith.constant 0 : i32
    %c0_i32_0 = arith.constant 0 : i32
    %c0_i32_1 = arith.constant 0 : i32
    %c0_i32_2 = arith.constant 0 : i32
    return %c0_i32, %c0_i32_0, %c0_i32_1 : i32, i32, i32
  }
  func.func @transform_8(%arg0: i32) -> (i32, i32) {
    %c0_i32 = arith.constant 0 : i32
    %c0_i32_0 = arith.constant 0 : i32
    %c0_i32_1 = arith.constant 0 : i32
    return %c0_i32, %c0_i32_0 : i32, i32
  }
  func.func @transform_9(%arg0: i32) -> (i32, i32) {
    %c0_i32 = arith.constant 0 : i32
    %c0_i32_0 = arith.constant 0 : i32
    %c0_i32_1 = arith.constant 0 : i32
    return %c0_i32, %c0_i32_0 : i32, i32
  }
  func.func @transform_10(%arg0: i32) -> (i32, i32) {
    %c0_i32 = arith.constant 0 : i32
    %c0_i32_0 = arith.constant 0 : i32
    %c0_i32_1 = arith.constant 0 : i32
    return %c0_i32, %c0_i32_0 : i32, i32
  }
  func.func @transform_11(%arg0: i32) -> (i32, i32) {
    %c0_i32 = arith.constant 0 : i32
    %c0_i32_0 = arith.constant 0 : i32
    %c0_i32_1 = arith.constant 0 : i32
    return %c0_i32, %c0_i32_0 : i32, i32
  }
  func.func @transform_12(%arg0: i32) -> (i32, i32) {
    %c0_i32 = arith.constant 0 : i32
    %c0_i32_0 = arith.constant 0 : i32
    %c0_i32_1 = arith.constant 0 : i32
    return %c0_i32, %c0_i32_0 : i32, i32
  }
  func.func @transform_13(%arg0: i32) -> (i32, i32) {
    %c0_i32 = arith.constant 0 : i32
    %c0_i32_0 = arith.constant 0 : i32
    return %arg0, %c0_i32 : i32, i32
  }
}

</mosaic_0001>

<llo_original>
// kernel: tpu_custom_call.1
$region0: #{tpu_custom_call.1}
  #allocation0 [shape = 'u32[]', space=smem, size = 0x4, offset = 0x4, fixed_abs, tag = 'smem constant byte address 0x4 - core index']
  #allocation1 [shape = 'u32[72,128]{1,0:T(1,128)}', space=vmem, size = 0x9000, scoped, tag = 'internal scratch']
  %s0 = inlined_call_operand.hbm [shape: f32[16,32], index: 0, kind: input, shape index: {}]
  %s1 = inlined_call_operand.hbm [shape: f32[16,16], index: 1, kind: input, shape index: {}]
  %s2 = inlined_call_operand.hbm [shape: bf16[32,64], index: 2, kind: input, shape index: {}]
  %s3 = inlined_call_operand.hbm [shape: bf16[16,64], index: 3, kind: input, shape index: {}]
  %s4 = inlined_call_operand.vmem [shape: f32[1,64], index: 4, kind: input, shape index: {}]
  %s5 = inlined_call_operand.hbm [shape: bf16[32,32], index: 5, kind: input, shape index: {}]
  %s6 = inlined_call_operand.vmem [shape: f32[1,32], index: 6, kind: input, shape index: {}]
  %s7 = inlined_call_operand.hbm [shape: bf16[4,256,128], index: 7, kind: input, shape index: {}]
  %s8 = inlined_call_operand.hbm [shape: bf16[32,128], index: 8, kind: input, shape index: {}]
  %s9 = inlined_call_operand.vmem [shape: f32[1,128], index: 9, kind: input, shape index: {}]
  %s10 = inlined_call_operand.vmem [shape: f32[1,128], index: 10, kind: input, shape index: {}]
  %s11 = inlined_call_operand.hbm [shape: bf16[128,128], index: 11, kind: input, shape index: {}]
  %s12 = inlined_call_operand.vmem [shape: f32[1,128], index: 12, kind: input, shape index: {}]
  %s13 = inlined_call_operand.hbm [shape: f32[16,128], index: 13, kind: output, shape index: {}]
  %s14 = sld [smem:[#allocation0]]
  $region117: #{tpu_custom_call.1} parent=0
    _
  %s16 = ssub.s32 1, %s14
  %s17 = scalar_select 0, %s16, %s14
  $region1: #{tpu_custom_call.1} parent=0
    #allocation2 [shape = 'u8[8192]{0}', space=vmem, size = 0x2000, scoped, tag = 'input window, operand 0']
    #allocation3 [shape = 's32[2]{0}', space=sflag, size = 0x8, scoped, tag = 'scoped memory for tpu_custom_call.1']
    #allocation4 [shape = 's32[2]{0}', space=sflag, size = 0x8, scoped, tag = 'scoped memory for tpu_custom_call.1']
    #allocation5 [shape = 'u8[8192]{0}', space=vmem, size = 0x2000, scoped, tag = 'input window, operand 1']
    #allocation6 [shape = 's32[2]{0}', space=sflag, size = 0x8, scoped, tag = 'scoped memory for tpu_custom_call.1']
    #allocation7 [shape = 'u8[8192]{0}', space=vmem, size = 0x2000, scoped, tag = 'input window, operand 2, single buffered']
    #allocation8 [shape = 'u8[4096]{0}', space=vmem, size = 0x1000, scoped, tag = 'input window, operand 3, single buffered']
    #allocation9 [shape = 's32[1]{0}', space=sflag, size = 0x4, scoped, tag = 'scoped memory for tpu_custom_call.1']
    #allocation10 [shape = 'u8[8192]{0}', space=vmem, size = 0x2000, scoped, tag = 'input window, operand 5, single buffered']
    #allocation11 [shape = 'u8[262144]{0}', space=vmem, size = 0x40000, scoped, tag = 'input window, operand 7, single buffered']
    #allocation12 [shape = 's32[1]{0}', space=sflag, size = 0x4, scoped, tag = 'scoped memory for tpu_custom_call.1']
    #allocation13 [shape = 'u8[8192]{0}', space=vmem, size = 0x2000, scoped, tag = 'input window, operand 8, single buffered']
    #allocation14 [shape = 'u8[32768]{0}', space=vmem, size = 0x8000, scoped, tag = 'input window, operand 11, single buffered']
    #allocation15 [shape = 's32[1]{0}', space=sflag, size = 0x4, scoped, tag = 'scoped memory for tpu_custom_call.1']
    #allocation16 [shape = 'u8[8192]{0}', space=vmem, size = 0x2000, scoped, tag = 'output window, operand 0']
    %18 = vsyncpa [#allocation3], 0
    %s19 = scalar_lea.sflag [#allocation3], 1
    %20 = vsyncpa %s19, 0
    %21 = vsyncpa [#allocation6], 0
    %s22 = scalar_lea.sflag [#allocation6], 1
    %23 = vsyncpa %s22, 0
    %24 = vsyncpa [#allocation9], 0
    %25 = vsyncpa [#allocation12], 0
    %26 = vsyncpa [#allocation15], 0
    %27 = vsyncpa [#allocation4], 0
    %s28 = scalar_lea.sflag [#allocation4], 1
    %29 = vsyncpa %s28, 0
    loop: start=0, step=1, limit=4
    $region2: #{tpu_custom_call.1} parent=1 // loop_pre_header
      _
    $region3: #{tpu_custom_call.1} parent=1 // loop_header
      %s31 = sphi 0, %s35
      %p32 = scmp.ge.s32.totalorder %s31, 4
      %s41 = sphi 0, %s43
      %s44 = sphi 0, %s41
      %s45 = sphi 0, %s44
      %s61 = sphi 0, %s45
      %s67 = sphi 0, %s69
      %s70 = sphi 0, %s67
      %s71 = sphi 0, %s70
      %s87 = sphi 0, %s71
      %s91 = sphi 0, %s91
      %s93 = sphi 0, %s91
      %s94 = sphi 0, %s93
      %s108 = sphi 0, %s94
      %s112 = sphi 0, %s112
      %s114 = sphi 0, %s112
      %s115 = sphi 0, %s114
      %s129 = sphi 0, %s115
      %s133 = sphi 0, %s133
      %s135 = sphi 0, %s133
      %s136 = sphi 0, %s135
      %s150 = sphi 0, %s136
      %s154 = sphi 0, %s154
      %s156 = sphi 0, %s154
      %s157 = sphi 0, %s156
      %s171 = sphi 0, %s157
      %s175 = sphi 0, %s175
      %s177 = sphi 0, %s175
      %s178 = sphi 0, %s177
      %s192 = sphi 0, %s178
      %s196 = sphi 0, %s196
      %s198 = sphi 0, %s196
      %s199 = sphi 0, %s198
      %s213 = sphi 0, %s199
      %s217 = sphi 0, %s217
      %s219 = sphi 0, %s217
      %s220 = sphi 0, %s219
      %s234 = sphi 0, %s220
      %s238 = sphi 0, %s238
      %s240 = sphi 0, %s238
      %s241 = sphi 0, %s240
      %s255 = sphi 0, %s241
      %s259 = sphi 0, %s259
      %s261 = sphi 0, %s259
      %s262 = sphi 0, %s261
      %s276 = sphi 0, %s262
      %s280 = sphi 0, %s280
      %s282 = sphi 0, %s280
      %s283 = sphi 0, %s282
      %s297 = sphi 0, %s283
      %s301 = sphi 0, %s301
      %s303 = sphi 0, %s301
      %s304 = sphi 0, %s303
      %s318 = sphi 0, %s304
      %s324 = sphi 0, %s326
      %s327 = sphi 0, %s324
      %s328 = sphi 0, %s327
      %s344 = sphi 0, %s328
    $region4: #{tpu_custom_call.1} parent=1 // loop_header_branch
      %34 = sbr.rel (%p32) target = $region8
    $region5: #{tpu_custom_call.1} parent=1 // loop_body
      %s36 = ssub.s32 %s31, 1
      %s37 = ssub.s32 %s31, 2
      %s38 = sadd.s32 %s31, 1
      %s39 = ssub.s32 %s31, %s38
      %p40 = scmp.eq.s32.totalorder %s39, 0
      %s42 = sadd.s32 %s41, 1
      %s43 = scalar_select %p40, %s41, %s42
      %p46 = pneg %p40
      %p47 = scmp.eq.s32.totalorder %s31, 1
      %p48 = por %p46, %p47
      %p49 = scmp.ne.s32.totalorder %s41, %s44
      %p50 = scmp.eq.s32.totalorder %s31, 0
      %p51 = por %p49, %p50
      %p52 = scmp.ne.s32.totalorder %s41, %s44
      %p53 = scmp.eq.s32.totalorder %s36, 1
      %p54 = por %p52, %p53
      %p55 = scmp.ne.s32.totalorder %s44, %s45
      %p56 = scmp.eq.s32.totalorder %s36, 0
      %p57 = por %p55, %p56
      %p58 = scmp.ne.s32.totalorder %s44, %s45
      %p59 = scmp.eq.s32.totalorder %s37, 1
      %p60 = por %p58, %p59
      %p62 = scmp.ne.s32.totalorder %s45, %s61
      %p63 = scmp.eq.s32.totalorder %s37, 0
      %p64 = por %p62, %p63
      %s65 = ssub.s32 %s31, %s38
      %p66 = scmp.eq.s32.totalorder %s65, 0
      %s68 = sadd.s32 %s67, 1
      %s69 = scalar_select %p66, %s67, %s68
      %p72 = pneg %p66
      %p73 = scmp.eq.s32.totalorder %s31, 1
      %p74 = por %p72, %p73
      %p75 = scmp.ne.s32.totalorder %s67, %s70
      %p76 = scmp.eq.s32.totalorder %s31, 0
      %p77 = por %p75, %p76
      %p78 = scmp.ne.s32.totalorder %s67, %s70
      %p79 = scmp.eq.s32.totalorder %s36, 1
      %p80 = por %p78, %p79
      %p81 = scmp.ne.s32.totalorder %s70, %s71
      %p82 = scmp.eq.s32.totalorder %s36, 0
      %p83 = por %p81, %p82
      %p84 = scmp.ne.s32.totalorder %s70, %s71
      %p85 = scmp.eq.s32.totalorder %s37, 1
      %p86 = por %p84, %p85
      %p88 = scmp.ne.s32.totalorder %s71, %s87
      %p89 = scmp.eq.s32.totalorder %s37, 0
      %p90 = por %p88, %p89
      %s92 = sadd.s32 %s91, 1
      %p95 = scmp.eq.s32.totalorder %s31, 1
      %p96 = scmp.ne.s32.totalorder %s91, %s93
      %p97 = scmp.eq.s32.totalorder %s31, 0
      %p98 = por %p96, %p97
      %p99 = scmp.ne.s32.totalorder %s91, %s93
      %p100 = scmp.eq.s32.totalorder %s36, 1
      %p101 = por %p99, %p100
      %p102 = scmp.ne.s32.totalorder %s93, %s94
      %p103 = scmp.eq.s32.totalorder %s36, 0
      %p104 = por %p102, %p103
      %p105 = scmp.ne.s32.totalorder %s93, %s94
      %p106 = scmp.eq.s32.totalorder %s37, 1
      %p107 = por %p105, %p106
      %p109 = scmp.ne.s32.totalorder %s94, %s108
      %p110 = scmp.eq.s32.totalorder %s37, 0
      %p111 = por %p109, %p110
      %s113 = sadd.s32 %s112, 1
      %p116 = scmp.eq.s32.totalorder %s31, 1
      %p117 = scmp.ne.s32.totalorder %s112, %s114
      %p118 = scmp.eq.s32.totalorder %s31, 0
      %p119 = por %p117, %p118
      %p120 = scmp.ne.s32.totalorder %s112, %s114
      %p121 = scmp.eq.s32.totalorder %s36, 1
      %p122 = por %p120, %p121
      %p123 = scmp.ne.s32.totalorder %s114, %s115
      %p124 = scmp.eq.s32.totalorder %s36, 0
      %p125 = por %p123, %p124
      %p126 = scmp.ne.s32.totalorder %s114, %s115
      %p127 = scmp.eq.s32.totalorder %s37, 1
      %p128 = por %p126, %p127
      %p130 = scmp.ne.s32.totalorder %s115, %s129
      %p131 = scmp.eq.s32.totalorder %s37, 0
      %p132 = por %p130, %p131
      %s134 = sadd.s32 %s133, 1
      %p137 = scmp.eq.s32.totalorder %s31, 1
      %p138 = scmp.ne.s32.totalorder %s133, %s135
      %p139 = scmp.eq.s32.totalorder %s31, 0
      %p140 = por %p138, %p139
      %p141 = scmp.ne.s32.totalorder %s133, %s135
      %p142 = scmp.eq.s32.totalorder %s36, 1
      %p143 = por %p141, %p142
      %p144 = scmp.ne.s32.totalorder %s135, %s136
      %p145 = scmp.eq.s32.totalorder %s36, 0
      %p146 = por %p144, %p145
      %p147 = scmp.ne.s32.totalorder %s135, %s136
      %p148 = scmp.eq.s32.totalorder %s37, 1
      %p149 = por %p147, %p148
      %p151 = scmp.ne.s32.totalorder %s136, %s150
      %p152 = scmp.eq.s32.totalorder %s37, 0
      %p153 = por %p151, %p152
      %s155 = sadd.s32 %s154, 1
      %p158 = scmp.eq.s32.totalorder %s31, 1
      %p159 = scmp.ne.s32.totalorder %s154, %s156
      %p160 = scmp.eq.s32.totalorder %s31, 0
      %p161 = por %p159, %p160
      %p162 = scmp.ne.s32.totalorder %s154, %s156
      %p163 = scmp.eq.s32.totalorder %s36, 1
      %p164 = por %p162, %p163
      %p165 = scmp.ne.s32.totalorder %s156, %s157
      %p166 = scmp.eq.s32.totalorder %s36, 0
      %p167 = por %p165, %p166
      %p168 = scmp.ne.s32.totalorder %s156, %s157
      %p169 = scmp.eq.s32.totalorder %s37, 1
      %p170 = por %p168, %p169
      %p172 = scmp.ne.s32.totalorder %s157, %s171
      %p173 = scmp.eq.s32.totalorder %s37, 0
      %p174 = por %p172, %p173
      %s176 = sadd.s32 %s175, 1
      %p179 = scmp.eq.s32.totalorder %s31, 1
      %p180 = scmp.ne.s32.totalorder %s175, %s177
      %p181 = scmp.eq.s32.totalorder %s31, 0
      %p182 = por %p180, %p181
      %p183 = scmp.ne.s32.totalorder %s175, %s177
      %p184 = scmp.eq.s32.totalorder %s36, 1
      %p185 = por %p183, %p184
      %p186 = scmp.ne.s32.totalorder %s177, %s178
      %p187 = scmp.eq.s32.totalorder %s36, 0
      %p188 = por %p186, %p187
      %p189 = scmp.ne.s32.totalorder %s177, %s178
      %p190 = scmp.eq.s32.totalorder %s37, 1
      %p191 = por %p189, %p190
      %p193 = scmp.ne.s32.totalorder %s178, %s192
      %p194 = scmp.eq.s32.totalorder %s37, 0
      %p195 = por %p193, %p194
      %s197 = sadd.s32 %s196, 1
      %p200 = scmp.eq.s32.totalorder %s31, 1
      %p201 = scmp.ne.s32.totalorder %s196, %s198
      %p202 = scmp.eq.s32.totalorder %s31, 0
      %p203 = por %p201, %p202
      %p204 = scmp.ne.s32.totalorder %s196, %s198
      %p205 = scmp.eq.s32.totalorder %s36, 1
      %p206 = por %p204, %p205
      %p207 = scmp.ne.s32.totalorder %s198, %s199
      %p208 = scmp.eq.s32.totalorder %s36, 0
      %p209 = por %p207, %p208
      %p210 = scmp.ne.s32.totalorder %s198, %s199
      %p211 = scmp.eq.s32.totalorder %s37, 1
      %p212 = por %p210, %p211
      %p214 = scmp.ne.s32.totalorder %s199, %s213
      %p215 = scmp.eq.s32.totalorder %s37, 0
      %p216 = por %p214, %p215
      %s218 = sadd.s32 %s217, 1
      %p221 = scmp.eq.s32.totalorder %s31, 1
      %p222 = scmp.ne.s32.totalorder %s217, %s219
      %p223 = scmp.eq.s32.totalorder %s31, 0
      %p224 = por %p222, %p223
      %p225 = scmp.ne.s32.totalorder %s217, %s219
      %p226 = scmp.eq.s32.totalorder %s36, 1
      %p227 = por %p225, %p226
      %p228 = scmp.ne.s32.totalorder %s219, %s220
      %p229 = scmp.eq.s32.totalorder %s36, 0
      %p230 = por %p228, %p229
      %p231 = scmp.ne.s32.totalorder %s219, %s220
      %p232 = scmp.eq.s32.totalorder %s37, 1
      %p233 = por %p231, %p232
      %p235 = scmp.ne.s32.totalorder %s220, %s234
      %p236 = scmp.eq.s32.totalorder %s37, 0
      %p237 = por %p235, %p236
      %s239 = sadd.s32 %s238, 1
      %p242 = scmp.eq.s32.totalorder %s31, 1
      %p243 = scmp.ne.s32.totalorder %s238, %s240
      %p244 = scmp.eq.s32.totalorder %s31, 0
      %p245 = por %p243, %p244
      %p246 = scmp.ne.s32.totalorder %s238, %s240
      %p247 = scmp.eq.s32.totalorder %s36, 1
      %p248 = por %p246, %p247
      %p249 = scmp.ne.s32.totalorder %s240, %s241
      %p250 = scmp.eq.s32.totalorder %s36, 0
      %p251 = por %p249, %p250
      %p252 = scmp.ne.s32.totalorder %s240, %s241
      %p253 = scmp.eq.s32.totalorder %s37, 1
      %p254 = por %p252, %p253
      %p256 = scmp.ne.s32.totalorder %s241, %s255
      %p257 = scmp.eq.s32.totalorder %s37, 0
      %p258 = por %p256, %p257
      %s260 = sadd.s32 %s259, 1
      %p263 = scmp.eq.s32.totalorder %s31, 1
      %p264 = scmp.ne.s32.totalorder %s259, %s261
      %p265 = scmp.eq.s32.totalorder %s31, 0
      %p266 = por %p264, %p265
      %p267 = scmp.ne.s32.totalorder %s259, %s261
      %p268 = scmp.eq.s32.totalorder %s36, 1
      %p269 = por %p267, %p268
      %p270 = scmp.ne.s32.totalorder %s261, %s262
      %p271 = scmp.eq.s32.totalorder %s36, 0
      %p272 = por %p270, %p271
      %p273 = scmp.ne.s32.totalorder %s261, %s262
      %p274 = scmp.eq.s32.totalorder %s37, 1
      %p275 = por %p273, %p274
      %p277 = scmp.ne.s32.totalorder %s262, %s276
      %p278 = scmp.eq.s32.totalorder %s37, 0
      %p279 = por %p277, %p278
      %s281 = sadd.s32 %s280, 1
      %p284 = scmp.eq.s32.totalorder %s31, 1
      %p285 = scmp.ne.s32.totalorder %s280, %s282
      %p286 = scmp.eq.s32.totalorder %s31, 0
      %p287 = por %p285, %p286
      %p288 = scmp.ne.s32.totalorder %s280, %s282
      %p289 = scmp.eq.s32.totalorder %s36, 1
      %p290 = por %p288, %p289
      %p291 = scmp.ne.s32.totalorder %s282, %s283
      %p292 = scmp.eq.s32.totalorder %s36, 0
      %p293 = por %p291, %p292
      %p294 = scmp.ne.s32.totalorder %s282, %s283
      %p295 = scmp.eq.s32.totalorder %s37, 1
      %p296 = por %p294, %p295
      %p298 = scmp.ne.s32.totalorder %s283, %s297
      %p299 = scmp.eq.s32.totalorder %s37, 0
      %p300 = por %p298, %p299
      %s302 = sadd.s32 %s301, 1
      %p305 = scmp.eq.s32.totalorder %s31, 1
      %p306 = scmp.ne.s32.totalorder %s301, %s303
      %p307 = scmp.eq.s32.totalorder %s31, 0
      %p308 = por %p306, %p307
      %p309 = scmp.ne.s32.totalorder %s301, %s303
      %p310 = scmp.eq.s32.totalorder %s36, 1
      %p311 = por %p309, %p310
      %p312 = scmp.ne.s32.totalorder %s303, %s304
      %p313 = scmp.eq.s32.totalorder %s36, 0
      %p314 = por %p312, %p313
      %p315 = scmp.ne.s32.totalorder %s303, %s304
      %p316 = scmp.eq.s32.totalorder %s37, 1
      %p317 = por %p315, %p316
      %p319 = scmp.ne.s32.totalorder %s304, %s318
      %p320 = scmp.eq.s32.totalorder %s37, 0
      %p321 = por %p319, %p320
      %s322 = ssub.s32 %s31, %s38
      %p323 = scmp.eq.s32.totalorder %s322, 0
      %s325 = sadd.s32 %s324, 1
      %s326 = scalar_select %p323, %s324, %s325
      %p329 = pneg %p323
      %p330 = scmp.eq.s32.totalorder %s31, 1
      %p331 = por %p329, %p330
      %p332 = scmp.ne.s32.totalorder %s324, %s327
      %p333 = scmp.eq.s32.totalorder %s31, 0
      %p334 = por %p332, %p333
      %p335 = scmp.ne.s32.totalorder %s324, %s327
      %p336 = scmp.eq.s32.totalorder %s36, 1
      %p337 = por %p335, %p336
      %p338 = scmp.ne.s32.totalorder %s327, %s328
      %p339 = scmp.eq.s32.totalorder %s36, 0
      %p340 = por %p338, %p339
      %p341 = scmp.ne.s32.totalorder %s327, %s328
      %p342 = scmp.eq.s32.totalorder %s37, 1
      %p343 = por %p341, %p342
      %p345 = scmp.ne.s32.totalorder %s328, %s344
      %p346 = scmp.eq.s32.totalorder %s37, 0
      %p347 = por %p345, %p346
      %p348 = scmp.le.s32.totalorder 1, %s31
      %p349 = scmp.lt.s32.totalorder %s31, 3
      %p350 = pnand %p348, %p349
      %p351 = pneg %p350
      // Predicated region
      $region9: #{tpu_custom_call.1} parent=5 // pred_check
        _
      $region10: #{tpu_custom_call.1} parent=5 // pred_check_branch
        %353 = sbr.rel (%p350) target = $region12
      $region11: #{tpu_custom_call.1} parent=5 // pred_region
        %s354 = ssub.s32 %s31, 1
        // Predicated region
        $region13: #{tpu_custom_call.1} parent=11 // pred_check
          %p355 = pneg %p104
        $region14: #{tpu_custom_call.1} parent=11 // pred_check_branch
          %357 = sbr.rel (%p355) target = $region16
        $region15: #{tpu_custom_call.1} parent=11 // pred_region
          %359 = vsyncadd [#allocation6], 0
          %s360 = sshll.u32 %s2, 4
          %s361 = int_to_ptr.hbm [resolvable:$true] %s360
          %s362 = sshll.u32 [#allocation7], 4
          %s363 = int_to_ptr.vmem [resolvable:$true] %s362
          %368 = dma.hbm_to_vmem [thread:$0]  %s361, 256, %s363, [#allocation6], 64, 64, 4
        $region16: #{tpu_custom_call.1} parent=11 // pred_fallthru
          _
        // Predicated region
        $region17: #{tpu_custom_call.1} parent=11 // pred_check
          %p369 = pneg %p125
        $region18: #{tpu_custom_call.1} parent=11 // pred_check_branch
          %371 = sbr.rel (%p369) target = $region20
        $region19: #{tpu_custom_call.1} parent=11 // pred_region
          %373 = vsyncadd [#allocation9], 0
          %s374 = sshll.u32 %s3, 4
          %s375 = int_to_ptr.hbm [resolvable:$true] %s374
          %s376 = sshll.u32 [#allocation8], 4
          %s377 = int_to_ptr.vmem [resolvable:$true] %s376
          %382 = dma.hbm_to_vmem [thread:$0]  %s375, 128, %s377, [#allocation9], 64, 64, 4
        $region20: #{tpu_custom_call.1} parent=11 // pred_fallthru
          _
        // Predicated region
        $region21: #{tpu_custom_call.1} parent=11 // pred_check
          %p383 = pneg %p146
        $region22: #{tpu_custom_call.1} parent=11 // pred_check_branch
          %385 = sbr.rel (%p383) target = $region24
        $region23: #{tpu_custom_call.1} parent=11 // pred_region
          _
        $region24: #{tpu_custom_call.1} parent=11 // pred_fallthru
          _
        // Predicated region
        $region25: #{tpu_custom_call.1} parent=11 // pred_check
          %p386 = pneg %p167
        $region26: #{tpu_custom_call.1} parent=11 // pred_check_branch
          %388 = sbr.rel (%p386) target = $region28
        $region27: #{tpu_custom_call.1} parent=11 // pred_region
          %390 = vsyncadd [#allocation9], 0
          %s391 = sshll.u32 %s5, 4
          %s392 = int_to_ptr.hbm [resolvable:$true] %s391
          %s393 = sshll.u32 [#allocation10], 4
          %s394 = int_to_ptr.vmem [resolvable:$true] %s393
          %399 = dma.hbm_to_vmem [thread:$0]  %s392, 256, %s394, [#allocation9], 64, 64, 4
        $region28: #{tpu_custom_call.1} parent=11 // pred_fallthru
          _
        // Predicated region
        $region29: #{tpu_custom_call.1} parent=11 // pred_check
          %p400 = pneg %p188
        $region30: #{tpu_custom_call.1} parent=11 // pred_check_branch
          %402 = sbr.rel (%p400) target = $region32
        $region31: #{tpu_custom_call.1} parent=11 // pred_region
          _
        $region32: #{tpu_custom_call.1} parent=11 // pred_fallthru
          _
        // Predicated region
        $region33: #{tpu_custom_call.1} parent=11 // pred_check
          %p403 = pneg %p209
        $region34: #{tpu_custom_call.1} parent=11 // pred_check_branch
          %405 = sbr.rel (%p403) target = $region36
        $region35: #{tpu_custom_call.1} parent=11 // pred_region
          %407 = vsyncadd [#allocation12], 0
          %s408 = sshll.u32 %s7, 4
          %s409 = int_to_ptr.hbm [resolvable:$true] %s408
          %s410 = sshll.u32 [#allocation11], 4
          %s411 = int_to_ptr.vmem [resolvable:$true] %s410
          %416 = dma.hbm_to_vmem [thread:$0]  %s409, 8192, %s411, [#allocation12], 64, 64, 4
        $region36: #{tpu_custom_call.1} parent=11 // pred_fallthru
          _
        // Predicated region
        $region37: #{tpu_custom_call.1} parent=11 // pred_check
          %p417 = pneg %p230
        $region38: #{tpu_custom_call.1} parent=11 // pred_check_branch
          %419 = sbr.rel (%p417) target = $region40
        $region39: #{tpu_custom_call.1} parent=11 // pred_region
          %421 = vsyncadd [#allocation12], 0
          %s422 = sshll.u32 %s8, 4
          %s423 = int_to_ptr.hbm [resolvable:$true] %s422
          %s424 = sshll.u32 [#allocation13], 4
          %s425 = int_to_ptr.vmem [resolvable:$true] %s424
          %430 = dma.hbm_to_vmem [thread:$0]  %s423, 256, %s425, [#allocation12], 64, 64, 4
        $region40: #{tpu_custom_call.1} parent=11 // pred_fallthru
          _
        // Predicated region
        $region41: #{tpu_custom_call.1} parent=11 // pred_check
          %p431 = pneg %p251
        $region42: #{tpu_custom_call.1} parent=11 // pred_check_branch
          %433 = sbr.rel (%p431) target = $region44
        $region43: #{tpu_custom_call.1} parent=11 // pred_region
          _
        $region44: #{tpu_custom_call.1} parent=11 // pred_fallthru
          _
        // Predicated region
        $region45: #{tpu_custom_call.1} parent=11 // pred_check
          %p434 = pneg %p272
        $region46: #{tpu_custom_call.1} parent=11 // pred_check_branch
          %436 = sbr.rel (%p434) target = $region48
        $region47: #{tpu_custom_call.1} parent=11 // pred_region
          _
        $region48: #{tpu_custom_call.1} parent=11 // pred_fallthru
          _
        // Predicated region
        $region49: #{tpu_custom_call.1} parent=11 // pred_check
          %p437 = pneg %p293
        $region50: #{tpu_custom_call.1} parent=11 // pred_check_branch
          %439 = sbr.rel (%p437) target = $region52
        $region51: #{tpu_custom_call.1} parent=11 // pred_region
          %441 = vsyncadd [#allocation15], 0
          %s442 = sshll.u32 %s11, 4
          %s443 = int_to_ptr.hbm [resolvable:$true] %s442
          %s444 = sshll.u32 [#allocation14], 4
          %s445 = int_to_ptr.vmem [resolvable:$true] %s444
          %450 = dma.hbm_to_vmem [thread:$0]  %s443, 1024, %s445, [#allocation15], 64, 64, 4
        $region52: #{tpu_custom_call.1} parent=11 // pred_fallthru
          _
        // Predicated region
        $region53: #{tpu_custom_call.1} parent=11 // pred_check
          %p451 = pneg %p314
        $region54: #{tpu_custom_call.1} parent=11 // pred_check_branch
          %453 = sbr.rel (%p451) target = $region56
        $region55: #{tpu_custom_call.1} parent=11 // pred_region
          _
        $region56: #{tpu_custom_call.1} parent=11 // pred_fallthru
          _
      $region12: #{tpu_custom_call.1} parent=5 // pred_fallthru
        _
      %p454 = scmp.lt.s32.totalorder %s31, 2
      // Predicated region
      $region57: #{tpu_custom_call.1} parent=5 // pred_check
        %p455 = pneg %p454
      $region58: #{tpu_custom_call.1} parent=5 // pred_check_branch
        %457 = sbr.rel (%p455) target = $region60
      $region59: #{tpu_custom_call.1} parent=5 // pred_region
        // Predicated region
        $region61: #{tpu_custom_call.1} parent=59 // pred_check
          %p458 = pneg %p51
        $region62: #{tpu_custom_call.1} parent=59 // pred_check_branch
          %460 = sbr.rel (%p458) target = $region64
        $region63: #{tpu_custom_call.1} parent=59 // pred_region
          %s461 = sand.u32 %s41, 1
          %s462 = scalar_lea.sflag [#allocation3], %s461
          %s463 = sand.u32 %s41, 1
          %s464 = smul.addr %s463, 8
          %s465 = scalar_lea.vmem [#allocation2], %s464
          %467 = vsyncadd %s462, 0
          %s468 = smul.addr %s31, 8
          %s469 = scalar_lea.hbm %s0, %s468
          %s471 = sshll.u32 %s469, 4
          %s472 = int_to_ptr.hbm [resolvable:$true] %s471
          %s473 = sshll.u32 %s465, 4
          %s474 = int_to_ptr.vmem [resolvable:$true] %s473
          %476 = dma.hbm_to_vmem [thread:$0]  %s472, 128, %s474, %s462
        $region64: #{tpu_custom_call.1} parent=59 // pred_fallthru
          _
        // Predicated region
        $region65: #{tpu_custom_call.1} parent=59 // pred_check
          %p477 = pneg %p77
        $region66: #{tpu_custom_call.1} parent=59 // pred_check_branch
          %479 = sbr.rel (%p477) target = $region68
        $region67: #{tpu_custom_call.1} parent=59 // pred_region
          %s480 = sand.u32 %s31, 1
          %s481 = scalar_lea.sflag [#allocation6], %s480
          %s482 = sand.u32 %s67, 1
          %s483 = smul.addr %s482, 8
          %s484 = scalar_lea.vmem [#allocation5], %s483
          %486 = vsyncadd %s481, 0
          %s487 = smul.addr %s31, 8
          %s488 = scalar_lea.hbm %s1, %s487
          %s490 = sshll.u32 %s488, 4
          %s491 = int_to_ptr.hbm [resolvable:$true] %s490
          %s492 = sshll.u32 %s484, 4
          %s493 = int_to_ptr.vmem [resolvable:$true] %s492
          %495 = dma.hbm_to_vmem [thread:$0]  %s491, 128, %s493, %s481
        $region68: #{tpu_custom_call.1} parent=59 // pred_fallthru
          _
      $region60: #{tpu_custom_call.1} parent=5 // pred_fallthru
        _
      %p496 = scmp.le.s32.totalorder 1, %s31
      %p497 = scmp.lt.s32.totalorder %s31, 3
      %p498 = pnand %p496, %p497
      %p499 = pneg %p498
      // Predicated region
      $region69: #{tpu_custom_call.1} parent=5 // pred_check
        _
      $region70: #{tpu_custom_call.1} parent=5 // pred_check_branch
        %501 = sbr.rel (%p498) target = $region72
      $region71: #{tpu_custom_call.1} parent=5 // pred_region
        %s502 = ssub.s32 %s31, 1
        %s503 = sand.u32 %s44, 1
        %s504 = scalar_lea.sflag [#allocation3], %s503
        %s505 = sand.u32 %s44, 1
        %s506 = smul.addr %s505, 8
        %s507 = scalar_lea.vmem [#allocation2], %s506
        // Predicated region
        $region73: #{tpu_custom_call.1} parent=71 // pred_check
          %p508 = pneg %p57
        $region74: #{tpu_custom_call.1} parent=71 // pred_check_branch
          %510 = sbr.rel (%p508) target = $region76
        $region75: #{tpu_custom_call.1} parent=71 // pred_region
          %512 = dma.done %s504, 128
        $region76: #{tpu_custom_call.1} parent=71 // pred_fallthru
          _
        %s513 = sand.u32 %s36, 1
        %s514 = scalar_lea.sflag [#allocation6], %s513
        %s515 = sand.u32 %s70, 1
        %s516 = smul.addr %s515, 8
        %s517 = scalar_lea.vmem [#allocation5], %s516
        // Predicated region
        $region77: #{tpu_custom_call.1} parent=71 // pred_check
          %p518 = pneg %p83
        $region78: #{tpu_custom_call.1} parent=71 // pred_check_branch
          %520 = sbr.rel (%p518) target = $region80
        $region79: #{tpu_custom_call.1} parent=71 // pred_region
          %522 = dma.done %s514, 128
        $region80: #{tpu_custom_call.1} parent=71 // pred_fallthru
          _
        // Predicated region
        $region81: #{tpu_custom_call.1} parent=71 // pred_check
          %p523 = pneg %p104
        $region82: #{tpu_custom_call.1} parent=71 // pred_check_branch
          %525 = sbr.rel (%p523) target = $region84
        $region83: #{tpu_custom_call.1} parent=71 // pred_region
          %527 = dma.done [#allocation6], 256
        $region84: #{tpu_custom_call.1} parent=71 // pred_fallthru
          _
        // Predicated region
        $region85: #{tpu_custom_call.1} parent=71 // pred_check
          %p528 = pneg %p125
        $region86: #{tpu_custom_call.1} parent=71 // pred_check_branch
          %530 = sbr.rel (%p528) target = $region88
        $region87: #{tpu_custom_call.1} parent=71 // pred_region
          %532 = dma.done [#allocation9], 128
        $region88: #{tpu_custom_call.1} parent=71 // pred_fallthru
          _
        // Predicated region
        $region89: #{tpu_custom_call.1} parent=71 // pred_check
          %p533 = pneg %p167
        $region90: #{tpu_custom_call.1} parent=71 // pred_check_branch
          %535 = sbr.rel (%p533) target = $region92
        $region91: #{tpu_custom_call.1} parent=71 // pred_region
          %537 = dma.done [#allocation9], 256
        $region92: #{tpu_custom_call.1} parent=71 // pred_fallthru
          _
        // Predicated region
        $region93: #{tpu_custom_call.1} parent=71 // pred_check
          %p538 = pneg %p209
        $region94: #{tpu_custom_call.1} parent=71 // pred_check_branch
          %540 = sbr.rel (%p538) target = $region96
        $region95: #{tpu_custom_call.1} parent=71 // pred_region
          %542 = dma.done [#allocation12], 8192
        $region96: #{tpu_custom_call.1} parent=71 // pred_fallthru
          _
        // Predicated region
        $region97: #{tpu_custom_call.1} parent=71 // pred_check
          %p543 = pneg %p230
        $region98: #{tpu_custom_call.1} parent=71 // pred_check_branch
          %545 = sbr.rel (%p543) target = $region100
        $region99: #{tpu_custom_call.1} parent=71 // pred_region
          %547 = dma.done [#allocation12], 256
        $region100: #{tpu_custom_call.1} parent=71 // pred_fallthru
          _
        // Predicated region
        $region101: #{tpu_custom_call.1} parent=71 // pred_check
          %p548 = pneg %p293
        $region102: #{tpu_custom_call.1} parent=71 // pred_check_branch
          %550 = sbr.rel (%p548) target = $region104
        $region103: #{tpu_custom_call.1} parent=71 // pred_region
          %552 = dma.done [#allocation15], 1024
        $region104: #{tpu_custom_call.1} parent=71 // pred_fallthru
          _
        %s553 = sand.u32 %s44, 1
        %s554 = scalar_lea.sflag [#allocation3], %s553
        %s555 = sand.u32 %s44, 1
        %s556 = smul.addr %s555, 8
        %s557 = scalar_lea.vmem [#allocation2], %s556
        %p558 = pneg %p57
        %p559 = pneg %p54
        %s560 = sand.u32 %s36, 1
        %s561 = scalar_lea.sflag [#allocation6], %s560
        %s562 = sand.u32 %s70, 1
        %s563 = smul.addr %s562, 8
        %s564 = scalar_lea.vmem [#allocation5], %s563
        %p565 = pneg %p83
        %p566 = pneg %p80
        %p567 = pneg %p104
        %p568 = pneg %p101
        %p569 = pneg %p125
        %p570 = pneg %p122
        %p571 = pneg %p146
        %p572 = pneg %p143
        %p573 = pneg %p167
        %p574 = pneg %p164
        %p575 = pneg %p188
        %p576 = pneg %p185
        %p577 = pneg %p209
        %p578 = pneg %p206
        %p579 = pneg %p230
        %p580 = pneg %p227
        %p581 = pneg %p251
        %p582 = pneg %p248
        %p583 = pneg %p272
        %p584 = pneg %p269
        %p585 = pneg %p293
        %p586 = pneg %p290
        %p587 = pneg %p314
        %p588 = pneg %p311
        %p589 = pneg %p340
        %p590 = pneg %p337
        %s591 = sand.u32 %s327, 1
        %s592 = scalar_lea.sflag [#allocation4], %s591
        %s593 = sand.u32 %s327, 1
        %s594 = smul.addr %s593, 8
        %s595 = scalar_lea.vmem [#allocation16], %s594
        %v597 = vld [vmem:[%s507] sm:$0xff]
        %v598 = vpack.c.bf16 %v597, %v597
        %v599 = vld [vmem:[%s517] sm:$0xff]
        %v600 = vpack.c.bf16 %v599, %v599
        %v601 = vld [vmem:[#allocation7] sm:$0xf]
        %v602 = vld [vmem:[#allocation7 + $0x4] sm:$0xf]
        %v603 = vld [vmem:[#allocation7 + $0x8] sm:$0xf]
        %v604 = vld [vmem:[#allocation7 + $0xc] sm:$0xf]
        %v605 = vld [vmem:[#allocation8] sm:$0xf]
        %v606 = vld [vmem:[#allocation8 + $0x4] sm:$0xf]
        %v609 = vunpack.c.l.b16 %v605
        %v610 = vunpack.c.l.b16 %v606
        %v611 = vpack.c.b16 %v610, %v609
        %vm613 = vcmask 130048
        %v615 = vsel %vm613, %v600, 0
        %617 = vmatpush.bf16.msra.mxu0 0
        %618 = vmatpush.bf16.msra.mxu0 0
        %619 = vmatpush.bf16.msra.mxu0 0
        %620 = vmatpush.bf16.msra.mxu0 0
        %621 = vmatpush.bf16.msra.mxu0 0
        %622 = vmatpush.bf16.msra.mxu0 0
        %623 = vmatpush.bf16.msra.mxu0 0
        %624 = vmatpush.bf16.msra.mxu0 %v611
        %625 = vmatmul.bf16.gmra.mxu0 %v615
        %v626 = vpop.f32.mrf.mxu0
        %v627 = vadd.f32 0.0, %v626
        %v628 = vpop.f32.mrf.mxu0
        %629 = vdwg.mxu0
        %v634 = vunpack.c.l.b16 %v601
        %v635 = vunpack.c.l.b16 %v602
        %v636 = vunpack.c.l.b16 %v603
        %v637 = vunpack.c.l.b16 %v604
        %v638 = vpack.c.b16 %v635, %v634
        %v639 = vpack.c.b16 %v637, %v636
        %vm642 = vcmask 261120
        %v644 = vsel %vm642, %v598, 0
        %646 = vmatpush.bf16.msra.mxu0 0
        %647 = vmatpush.bf16.msra.mxu0 0
        %648 = vmatpush.bf16.msra.mxu0 0
        %649 = vmatpush.bf16.msra.mxu0 0
        %650 = vmatpush.bf16.msra.mxu0 0
        %651 = vmatpush.bf16.msra.mxu0 0
        %652 = vmatpush.bf16.msra.mxu0 %v639
        %653 = vmatpush.bf16.msra.mxu0 %v638
        %654 = vmatmul.bf16.gmra.mxu0 %v644
        %v655 = vpop.f32.mrf.mxu0
        %v656 = vadd.f32 %v627, %v655
        %v657 = vpop.f32.mrf.mxu0
        %658 = vdwg.mxu0
        %v659 = vld [vmem:[%s4] sm:$0x1]
        %v661 = vperm.slane %v659, 0
        %v663 = vadd.f32 %v656, %v661
        %v664 = vmax.f32 %v663, 0.0
        %v665 = vpack.c.bf16 %v664, %v664
        %v666 = vld [vmem:[#allocation10] sm:$0xf]
        %v667 = vld [vmem:[#allocation10 + $0x4] sm:$0xf]
        %v668 = vld [vmem:[#allocation10 + $0x8] sm:$0xf]
        %v669 = vld [vmem:[#allocation10 + $0xc] sm:$0xf]
        %v670 = vld [vmem:[%s6] sm:$0x1]
        %v672 = vperm.slane %v670, 0
        %v678 = vunpack.c.l.b16 %v666
        %v679 = vunpack.c.l.b16 %v667
        %v680 = vunpack.c.l.b16 %v668
        %v681 = vunpack.c.l.b16 %v669
        %v682 = vpack.c.b16 %v679, %v678
        %v683 = vpack.c.b16 %v681, %v680
        %v687 = vsel %vm642, %v665, 0
        %689 = vmatpush.bf16.msra.mxu0 0
        %690 = vmatpush.bf16.msra.mxu0 0
        %691 = vmatpush.bf16.msra.mxu0 0
        %692 = vmatpush.bf16.msra.mxu0 0
        %693 = vmatpush.bf16.msra.mxu0 0
        %694 = vmatpush.bf16.msra.mxu0 0
        %695 = vmatpush.bf16.msra.mxu0 %v683
        %696 = vmatpush.bf16.msra.mxu0 %v682
        %697 = vmatmul.bf16.gmra.mxu0 %v687
        %v698 = vpop.f32.mrf.mxu0
        %v699 = vadd.f32 %v672, %v698
        %v700 = vpop.f32.mrf.mxu0
        %701 = vdwg.mxu0
        %v702 = vpack.c.bf16 %v699, %v699
        %v703 = vld [vmem:[#allocation13] sm:$0xf]
        %v704 = vld [vmem:[#allocation13 + $0x4] sm:$0xf]
        %v705 = vld [vmem:[#allocation13 + $0x8] sm:$0xf]
        %v706 = vld [vmem:[#allocation13 + $0xc] sm:$0xf]
        %708 = vset.pattern.permute.xlu0 0
        %709 = vperm.xlu0 %708, %v699
        %v710 = vpop.permute.xlu0 %709
        %v712 = vmul.f32 %v710, %v664
        %v713 = vpack.c.bf16 %v712, %v712
        %714 = vset.pattern.permute.xlu0 1
        %715 = vperm.xlu0 %714, %v699
        %v716 = vpop.permute.xlu0 %715
        %v718 = vmul.f32 %v716, %v664
        %v719 = vpack.c.bf16 %v718, %v718
        %720 = vset.pattern.permute.xlu0 2
        %721 = vperm.xlu0 %720, %v699
        %v722 = vpop.permute.xlu0 %721
        %v724 = vmul.f32 %v722, %v664
        %v725 = vpack.c.bf16 %v724, %v724
        %726 = vset.pattern.permute.xlu0 3
        %727 = vperm.xlu0 %726, %v699
        %v728 = vpop.permute.xlu0 %727
        %v730 = vmul.f32 %v728, %v664
        %v731 = vpack.c.bf16 %v730, %v730
        %732 = vset.pattern.permute.xlu0 4
        %733 = vperm.xlu0 %732, %v699
        %v734 = vpop.permute.xlu0 %733
        %v736 = vmul.f32 %v734, %v664
        %v737 = vpack.c.bf16 %v736, %v736
        %738 = vset.pattern.permute.xlu0 5
        %739 = vperm.xlu0 %738, %v699
        %v740 = vpop.permute.xlu0 %739
        %v742 = vmul.f32 %v740, %v664
        %v743 = vpack.c.bf16 %v742, %v742
        %744 = vset.pattern.permute.xlu0 6
        %745 = vperm.xlu0 %744, %v699
        %v746 = vpop.permute.xlu0 %745
        %v748 = vmul.f32 %v746, %v664
        %v749 = vpack.c.bf16 %v748, %v748
        %750 = vset.pattern.permute.xlu0 7
        %751 = vperm.xlu0 %750, %v699
        %v752 = vpop.permute.xlu0 %751
        %v754 = vmul.f32 %v752, %v664
        %v755 = vpack.c.bf16 %v754, %v754
        %v757 = vunpack.c.l.b16 %v713
        %v758 = vpack.c.b16 %v757, %v757
        %759 = vrot.lane.b32.xlu0 %v758, 96
        %v760 = vpop.permute.xlu0 %759
        %v762 = vunpack.c.l.b16 %v725
        %v763 = vpack.c.b16 %v762, %v762
        %764 = vrot.lane.b32.xlu0 %v763, 32
        %v765 = vpop.permute.xlu0 %764
        %v767 = vunpack.c.l.b16 %v731
        %v768 = vpack.c.b16 %v767, %v767
        %769 = vrot.lane.b32.xlu0 %v768, 64
        %v770 = vpop.permute.xlu0 %769
        %v772 = vunpack.c.l.b16 %v737
        %v773 = vpack.c.b16 %v772, %v772
        %774 = vrot.lane.b32.xlu0 %v773, 96
        %v775 = vpop.permute.xlu0 %774
        %v777 = vunpack.c.l.b16 %v749
        %v778 = vpack.c.b16 %v777, %v777
        %779 = vrot.lane.b32.xlu0 %v778, 32
        %v780 = vpop.permute.xlu0 %779
        %v782 = vunpack.c.l.b16 %v755
        %v783 = vpack.c.b16 %v782, %v782
        %784 = vrot.lane.b32.xlu0 %v783, 64
        %v785 = vpop.permute.xlu0 %784
        %v788 = vsel %vm642, %v760, %v719
        %vm789 = vcmask 523264
        %v791 = vsel %vm789, %v788, %v765
        %vm792 = vcmask 785408
        %v794 = vsel %vm792, %v791, %v770
        %v798 = vsel %vm642, %v775, %v743
        %v800 = vsel %vm789, %v798, %v780
        %v802 = vsel %vm792, %v800, %v785
        %v804 = vld [vmem:[#allocation11] sm:$0xf]
        %v805 = vld [vmem:[#allocation11 + $0x4] sm:$0xf]
        %v806 = vld [vmem:[#allocation11 + $0x8] sm:$0xf]
        %v807 = vld [vmem:[#allocation11 + $0xc] sm:$0xf]
        %v808 = vld [vmem:[#allocation11 + $0x10] sm:$0xf]
        %v809 = vld [vmem:[#allocation11 + $0x14] sm:$0xf]
        %v810 = vld [vmem:[#allocation11 + $0x18] sm:$0xf]
        %v811 = vld [vmem:[#allocation11 + $0x1c] sm:$0xf]
        %v812 = vld [vmem:[#allocation11 + $0x20] sm:$0xf]
        %v813 = vld [vmem:[#allocation11 + $0x24] sm:$0xf]
        %v814 = vld [vmem:[#allocation11 + $0x28] sm:$0xf]
        %v815 = vld [vmem:[#allocation11 + $0x2c] sm:$0xf]
        %v816 = vld [vmem:[#allocation11 + $0x30] sm:$0xf]
        %v817 = vld [vmem:[#allocation11 + $0x34] sm:$0xf]
        %v818 = vld [vmem:[#allocation11 + $0x38] sm:$0xf]
        %v819 = vld [vmem:[#allocation11 + $0x3c] sm:$0xf]
        %v820 = vld [vmem:[#allocation11 + $0x40] sm:$0xf]
        %v821 = vld [vmem:[#allocation11 + $0x44] sm:$0xf]
        %v822 = vld [vmem:[#allocation11 + $0x48] sm:$0xf]
        %v823 = vld [vmem:[#allocation11 + $0x4c] sm:$0xf]
        %v824 = vld [vmem:[#allocation11 + $0x50] sm:$0xf]
        %v825 = vld [vmem:[#allocation11 + $0x54] sm:$0xf]
        %v826 = vld [vmem:[#allocation11 + $0x58] sm:$0xf]
        %v827 = vld [vmem:[#allocation11 + $0x5c] sm:$0xf]
        %v828 = vld [vmem:[#allocation11 + $0x60] sm:$0xf]
        %v829 = vld [vmem:[#allocation11 + $0x64] sm:$0xf]
        %v830 = vld [vmem:[#allocation11 + $0x68] sm:$0xf]
        %v831 = vld [vmem:[#allocation11 + $0x6c] sm:$0xf]
        %v832 = vld [vmem:[#allocation11 + $0x70] sm:$0xf]
        %v833 = vld [vmem:[#allocation11 + $0x74] sm:$0xf]
        %v834 = vld [vmem:[#allocation11 + $0x78] sm:$0xf]
        %v835 = vld [vmem:[#allocation11 + $0x7c] sm:$0xf]
        %v868 = vunpack.c.l.b16 %v804
        %v869 = vunpack.c.l.b16 %v805
        %v870 = vunpack.c.l.b16 %v806
        %v871 = vunpack.c.l.b16 %v807
        %v872 = vunpack.c.l.b16 %v808
        %v873 = vunpack.c.l.b16 %v809
        %v874 = vunpack.c.l.b16 %v810
        %v875 = vunpack.c.l.b16 %v811
        %v876 = vunpack.c.l.b16 %v812
        %v877 = vunpack.c.l.b16 %v813
        %v878 = vunpack.c.l.b16 %v814
        %v879 = vunpack.c.l.b16 %v815
        %v880 = vunpack.c.l.b16 %v816
        %v881 = vunpack.c.l.b16 %v817
        %v882 = vunpack.c.l.b16 %v818
        %v883 = vunpack.c.l.b16 %v819
        %v884 = vunpack.c.l.b16 %v820
        %v885 = vunpack.c.l.b16 %v821
        %v886 = vunpack.c.l.b16 %v822
        %v887 = vunpack.c.l.b16 %v823
        %v888 = vunpack.c.l.b16 %v824
        %v889 = vunpack.c.l.b16 %v825
        %v890 = vunpack.c.l.b16 %v826
        %v891 = vunpack.c.l.b16 %v827
        %v892 = vunpack.c.l.b16 %v828
        %v893 = vunpack.c.l.b16 %v829
        %v894 = vunpack.c.l.b16 %v830
        %v895 = vunpack.c.l.b16 %v831
        %v896 = vunpack.c.l.b16 %v832
        %v897 = vunpack.c.l.b16 %v833
        %v898 = vunpack.c.l.b16 %v834
        %v899 = vunpack.c.l.b16 %v835
        %v900 = vpack.c.b16 %v869, %v868
        %v901 = vpack.c.b16 %v871, %v870
        %v902 = vpack.c.b16 %v873, %v872
        %v903 = vpack.c.b16 %v875, %v874
        %v904 = vpack.c.b16 %v877, %v876
        %v905 = vpack.c.b16 %v879, %v878
        %v906 = vpack.c.b16 %v881, %v880
        %v907 = vpack.c.b16 %v883, %v882
        %v908 = vpack.c.b16 %v885, %v884
        %v909 = vpack.c.b16 %v887, %v886
        %v910 = vpack.c.b16 %v889, %v888
        %v911 = vpack.c.b16 %v891, %v890
        %v912 = vpack.c.b16 %v893, %v892
        %v913 = vpack.c.b16 %v895, %v894
        %v914 = vpack.c.b16 %v897, %v896
        %v915 = vpack.c.b16 %v899, %v898
        %932 = vmatpush.bf16.msra.mxu0 %v907
        %933 = vmatpush.bf16.msra.mxu0 %v906
        %934 = vmatpush.bf16.msra.mxu0 %v905
        %935 = vmatpush.bf16.msra.mxu0 %v904
        %936 = vmatpush.bf16.msra.mxu0 %v903
        %937 = vmatpush.bf16.msra.mxu0 %v902
        %938 = vmatpush.bf16.msra.mxu0 %v901
        %939 = vmatpush.bf16.msra.mxu0 %v900
        %940 = vmatmul.bf16.gmra.mxu0 %v794
        %v941 = vpop.f32.mrf.mxu0
        %v942 = vadd.f32 0.0, %v941
        %v943 = vpop.f32.mrf.mxu0
        %944 = vdwg.mxu0
        %945 = vmatpush.bf16.msra.mxu0 %v915
        %946 = vmatpush.bf16.msra.mxu0 %v914
        %947 = vmatpush.bf16.msra.mxu0 %v913
        %948 = vmatpush.bf16.msra.mxu0 %v912
        %949 = vmatpush.bf16.msra.mxu0 %v911
        %950 = vmatpush.bf16.msra.mxu0 %v910
        %951 = vmatpush.bf16.msra.mxu0 %v909
        %952 = vmatpush.bf16.msra.mxu0 %v908
        %953 = vmatmul.bf16.gmra.mxu0 %v802
        %v954 = vpop.f32.mrf.mxu0
        %v955 = vadd.f32 %v942, %v954
        %v956 = vpop.f32.mrf.mxu0
        %957 = vdwg.mxu0
        %v962 = vunpack.c.l.b16 %v703
        %v963 = vunpack.c.l.b16 %v704
        %v964 = vunpack.c.l.b16 %v705
        %v965 = vunpack.c.l.b16 %v706
        %v966 = vpack.c.b16 %v963, %v962
        %v967 = vpack.c.b16 %v965, %v964
        %v971 = vsel %vm642, %v702, 0
        %973 = vmatpush.bf16.msra.mxu0 0
        %974 = vmatpush.bf16.msra.mxu0 0
        %975 = vmatpush.bf16.msra.mxu0 0
        %976 = vmatpush.bf16.msra.mxu0 0
        %977 = vmatpush.bf16.msra.mxu0 0
        %978 = vmatpush.bf16.msra.mxu0 0
        %979 = vmatpush.bf16.msra.mxu0 %v967
        %980 = vmatpush.bf16.msra.mxu0 %v966
        %981 = vmatmul.bf16.gmra.mxu0 %v971
        %v982 = vpop.f32.mrf.mxu0
        %v983 = vadd.f32 %v955, %v982
        %v984 = vpop.f32.mrf.mxu0
        %985 = vdwg.mxu0
        %986 = vset.pattern.permute.xlu0 8
        %987 = vperm.xlu0 %986, %v699
        %v988 = vpop.permute.xlu0 %987
        %v990 = vmul.f32 %v988, %v664
        %v991 = vpack.c.bf16 %v990, %v990
        %992 = vset.pattern.permute.xlu0 9
        %993 = vperm.xlu0 %992, %v699
        %v994 = vpop.permute.xlu0 %993
        %v996 = vmul.f32 %v994, %v664
        %v997 = vpack.c.bf16 %v996, %v996
        %998 = vset.pattern.permute.xlu0 10
        %999 = vperm.xlu0 %998, %v699
        %v1000 = vpop.permute.xlu0 %999
        %v1002 = vmul.f32 %v1000, %v664
        %v1003 = vpack.c.bf16 %v1002, %v1002
        %1004 = vset.pattern.permute.xlu0 11
        %1005 = vperm.xlu0 %1004, %v699
        %v1006 = vpop.permute.xlu0 %1005
        %v1008 = vmul.f32 %v1006, %v664
        %v1009 = vpack.c.bf16 %v1008, %v1008
        %1010 = vset.pattern.permute.xlu0 12
        %1011 = vperm.xlu0 %1010, %v699
        %v1012 = vpop.permute.xlu0 %1011
        %v1014 = vmul.f32 %v1012, %v664
        %v1015 = vpack.c.bf16 %v1014, %v1014
        %1016 = vset.pattern.permute.xlu0 13
        %1017 = vperm.xlu0 %1016, %v699
        %v1018 = vpop.permute.xlu0 %1017
        %v1020 = vmul.f32 %v1018, %v664
        %v1021 = vpack.c.bf16 %v1020, %v1020
        %1022 = vset.pattern.permute.xlu0 14
        %1023 = vperm.xlu0 %1022, %v699
        %v1024 = vpop.permute.xlu0 %1023
        %v1026 = vmul.f32 %v1024, %v664
        %v1027 = vpack.c.bf16 %v1026, %v1026
        %1028 = vset.pattern.permute.xlu0 15
        %1029 = vperm.xlu0 %1028, %v699
        %v1030 = vpop.permute.xlu0 %1029
        %v1032 = vmul.f32 %v1030, %v664
        %v1033 = vpack.c.bf16 %v1032, %v1032
        %v1035 = vunpack.c.l.b16 %v991
        %v1036 = vpack.c.b16 %v1035, %v1035
        %1037 = vrot.lane.b32.xlu0 %v1036, 96
        %v1038 = vpop.permute.xlu0 %1037
        %v1040 = vunpack.c.l.b16 %v1003
        %v1041 = vpack.c.b16 %v1040, %v1040
        %1042 = vrot.lane.b32.xlu0 %v1041, 32
        %v1043 = vpop.permute.xlu0 %1042
        %v1045 = vunpack.c.l.b16 %v1009
        %v1046 = vpack.c.b16 %v1045, %v1045
        %1047 = vrot.lane.b32.xlu0 %v1046, 64
        %v1048 = vpop.permute.xlu0 %1047
        %v1050 = vunpack.c.l.b16 %v1015
        %v1051 = vpack.c.b16 %v1050, %v1050
        %1052 = vrot.lane.b32.xlu0 %v1051, 96
        %v1053 = vpop.permute.xlu0 %1052
        %v1055 = vunpack.c.l.b16 %v1027
        %v1056 = vpack.c.b16 %v1055, %v1055
        %1057 = vrot.lane.b32.xlu0 %v1056, 32
        %v1058 = vpop.permute.xlu0 %1057
        %v1060 = vunpack.c.l.b16 %v1033
        %v1061 = vpack.c.b16 %v1060, %v1060
        %1062 = vrot.lane.b32.xlu0 %v1061, 64
        %v1063 = vpop.permute.xlu0 %1062
        %v1066 = vsel %vm642, %v1038, %v997
        %v1068 = vsel %vm789, %v1066, %v1043
        %v1070 = vsel %vm792, %v1068, %v1048
        %v1074 = vsel %vm642, %v1053, %v1021
        %v1076 = vsel %vm789, %v1074, %v1058
        %v1078 = vsel %vm792, %v1076, %v1063
        %s1080 = scalar_lea.vmem [#allocation11], 128
        %v1081 = vld [vmem:[%s1080] sm:$0xf]
        %v1082 = vld [vmem:[%s1080 + $0x4] sm:$0xf]
        %v1083 = vld [vmem:[%s1080 + $0x8] sm:$0xf]
        %v1084 = vld [vmem:[%s1080 + $0xc] sm:$0xf]
        %v1085 = vld [vmem:[%s1080 + $0x10] sm:$0xf]
        %v1086 = vld [vmem:[%s1080 + $0x14] sm:$0xf]
        %v1087 = vld [vmem:[%s1080 + $0x18] sm:$0xf]
        %v1088 = vld [vmem:[%s1080 + $0x1c] sm:$0xf]
        %v1089 = vld [vmem:[%s1080 + $0x20] sm:$0xf]
        %v1090 = vld [vmem:[%s1080 + $0x24] sm:$0xf]
        %v1091 = vld [vmem:[%s1080 + $0x28] sm:$0xf]
        %v1092 = vld [vmem:[%s1080 + $0x2c] sm:$0xf]
        %v1093 = vld [vmem:[%s1080 + $0x30] sm:$0xf]
        %v1094 = vld [vmem:[%s1080 + $0x34] sm:$0xf]
        %v1095 = vld [vmem:[%s1080 + $0x38] sm:$0xf]
        %v1096 = vld [vmem:[%s1080 + $0x3c] sm:$0xf]
        %v1097 = vld [vmem:[%s1080 + $0x40] sm:$0xf]
        %v1098 = vld [vmem:[%s1080 + $0x44] sm:$0xf]
        %v1099 = vld [vmem:[%s1080 + $0x48] sm:$0xf]
        %v1100 = vld [vmem:[%s1080 + $0x4c] sm:$0xf]
        %v1101 = vld [vmem:[%s1080 + $0x50] sm:$0xf]
        %v1102 = vld [vmem:[%s1080 + $0x54] sm:$0xf]
        %v1103 = vld [vmem:[%s1080 + $0x58] sm:$0xf]
        %v1104 = vld [vmem:[%s1080 + $0x5c] sm:$0xf]
        %v1105 = vld [vmem:[%s1080 + $0x60] sm:$0xf]
        %v1106 = vld [vmem:[%s1080 + $0x64] sm:$0xf]
        %v1107 = vld [vmem:[%s1080 + $0x68] sm:$0xf]
        %v1108 = vld [vmem:[%s1080 + $0x6c] sm:$0xf]
        %v1109 = vld [vmem:[%s1080 + $0x70] sm:$0xf]
        %v1110 = vld [vmem:[%s1080 + $0x74] sm:$0xf]
        %v1111 = vld [vmem:[%s1080 + $0x78] sm:$0xf]
        %v1112 = vld [vmem:[%s1080 + $0x7c] sm:$0xf]
        %v1145 = vunpack.c.l.b16 %v1081
        %v1146 = vunpack.c.l.b16 %v1082
        %v1147 = vunpack.c.l.b16 %v1083
        %v1148 = vunpack.c.l.b16 %v1084
        %v1149 = vunpack.c.l.b16 %v1085
        %v1150 = vunpack.c.l.b16 %v1086
        %v1151 = vunpack.c.l.b16 %v1087
        %v1152 = vunpack.c.l.b16 %v1088
        %v1153 = vunpack.c.l.b16 %v1089
        %v1154 = vunpack.c.l.b16 %v1090
        %v1155 = vunpack.c.l.b16 %v1091
        %v1156 = vunpack.c.l.b16 %v1092
        %v1157 = vunpack.c.l.b16 %v1093
        %v1158 = vunpack.c.l.b16 %v1094
        %v1159 = vunpack.c.l.b16 %v1095
        %v1160 = vunpack.c.l.b16 %v1096
        %v1161 = vunpack.c.l.b16 %v1097
        %v1162 = vunpack.c.l.b16 %v1098
        %v1163 = vunpack.c.l.b16 %v1099
        %v1164 = vunpack.c.l.b16 %v1100
        %v1165 = vunpack.c.l.b16 %v1101
        %v1166 = vunpack.c.l.b16 %v1102
        %v1167 = vunpack.c.l.b16 %v1103
        %v1168 = vunpack.c.l.b16 %v1104
        %v1169 = vunpack.c.l.b16 %v1105
        %v1170 = vunpack.c.l.b16 %v1106
        %v1171 = vunpack.c.l.b16 %v1107
        %v1172 = vunpack.c.l.b16 %v1108
        %v1173 = vunpack.c.l.b16 %v1109
        %v1174 = vunpack.c.l.b16 %v1110
        %v1175 = vunpack.c.l.b16 %v1111
        %v1176 = vunpack.c.l.b16 %v1112
        %v1177 = vpack.c.b16 %v1146, %v1145
        %v1178 = vpack.c.b16 %v1148, %v1147
        %v1179 = vpack.c.b16 %v1150, %v1149
        %v1180 = vpack.c.b16 %v1152, %v1151
        %v1181 = vpack.c.b16 %v1154, %v1153
        %v1182 = vpack.c.b16 %v1156, %v1155
        %v1183 = vpack.c.b16 %v1158, %v1157
        %v1184 = vpack.c.b16 %v1160, %v1159
        %v1185 = vpack.c.b16 %v1162, %v1161
        %v1186 = vpack.c.b16 %v1164, %v1163
        %v1187 = vpack.c.b16 %v1166, %v1165
        %v1188 = vpack.c.b16 %v1168, %v1167
        %v1189 = vpack.c.b16 %v1170, %v1169
        %v1190 = vpack.c.b16 %v1172, %v1171
        %v1191 = vpack.c.b16 %v1174, %v1173
        %v1192 = vpack.c.b16 %v1176, %v1175
        %1209 = vmatpush.bf16.msra.mxu0 %v1184
        %1210 = vmatpush.bf16.msra.mxu0 %v1183
        %1211 = vmatpush.bf16.msra.mxu0 %v1182
        %1212 = vmatpush.bf16.msra.mxu0 %v1181
        %1213 = vmatpush.bf16.msra.mxu0 %v1180
        %1214 = vmatpush.bf16.msra.mxu0 %v1179
        %1215 = vmatpush.bf16.msra.mxu0 %v1178
        %1216 = vmatpush.bf16.msra.mxu0 %v1177
        %1217 = vmatmul.bf16.gmra.mxu0 %v1070
        %v1218 = vpop.f32.mrf.mxu0
        %v1219 = vadd.f32 0.0, %v1218
        %v1220 = vpop.f32.mrf.mxu0
        %1221 = vdwg.mxu0
        %1222 = vmatpush.bf16.msra.mxu0 %v1192
        %1223 = vmatpush.bf16.msra.mxu0 %v1191
        %1224 = vmatpush.bf16.msra.mxu0 %v1190
        %1225 = vmatpush.bf16.msra.mxu0 %v1189
        %1226 = vmatpush.bf16.msra.mxu0 %v1188
        %1227 = vmatpush.bf16.msra.mxu0 %v1187
        %1228 = vmatpush.bf16.msra.mxu0 %v1186
        %1229 = vmatpush.bf16.msra.mxu0 %v1185
        %1230 = vmatmul.bf16.gmra.mxu0 %v1078
        %v1231 = vpop.f32.mrf.mxu0
        %v1232 = vadd.f32 %v1219, %v1231
        %v1233 = vpop.f32.mrf.mxu0
        %1234 = vdwg.mxu0
        %v1235 = vadd.f32 %v983, %v1232
        %1236 = vset.pattern.permute.xlu0 16
        %1237 = vperm.xlu0 %1236, %v699
        %v1238 = vpop.permute.xlu0 %1237
        %v1240 = vmul.f32 %v1238, %v664
        %v1241 = vpack.c.bf16 %v1240, %v1240
        %1242 = vset.pattern.permute.xlu0 17
        %1243 = vperm.xlu0 %1242, %v699
        %v1244 = vpop.permute.xlu0 %1243
        %v1246 = vmul.f32 %v1244, %v664
        %v1247 = vpack.c.bf16 %v1246, %v1246
        %1248 = vset.pattern.permute.xlu0 18
        %1249 = vperm.xlu0 %1248, %v699
        %v1250 = vpop.permute.xlu0 %1249
        %v1252 = vmul.f32 %v1250, %v664
        %v1253 = vpack.c.bf16 %v1252, %v1252
        %1254 = vset.pattern.permute.xlu0 19
        %1255 = vperm.xlu0 %1254, %v699
        %v1256 = vpop.permute.xlu0 %1255
        %v1258 = vmul.f32 %v1256, %v664
        %v1259 = vpack.c.bf16 %v1258, %v1258
        %1260 = vset.pattern.permute.xlu0 20
        %1261 = vperm.xlu0 %1260, %v699
        %v1262 = vpop.permute.xlu0 %1261
        %v1264 = vmul.f32 %v1262, %v664
        %v1265 = vpack.c.bf16 %v1264, %v1264
        %1266 = vset.pattern.permute.xlu0 21
        %1267 = vperm.xlu0 %1266, %v699
        %v1268 = vpop.permute.xlu0 %1267
        %v1270 = vmul.f32 %v1268, %v664
        %v1271 = vpack.c.bf16 %v1270, %v1270
        %1272 = vset.pattern.permute.xlu0 22
        %1273 = vperm.xlu0 %1272, %v699
        %v1274 = vpop.permute.xlu0 %1273
        %v1276 = vmul.f32 %v1274, %v664
        %v1277 = vpack.c.bf16 %v1276, %v1276
        %1278 = vset.pattern.permute.xlu0 23
        %1279 = vperm.xlu0 %1278, %v699
        %v1280 = vpop.permute.xlu0 %1279
        %v1282 = vmul.f32 %v1280, %v664
        %v1283 = vpack.c.bf16 %v1282, %v1282
        %v1285 = vunpack.c.l.b16 %v1241
        %v1286 = vpack.c.b16 %v1285, %v1285
        %1287 = vrot.lane.b32.xlu0 %v1286, 96
        %v1288 = vpop.permute.xlu0 %1287
        %v1290 = vunpack.c.l.b16 %v1253
        %v1291 = vpack.c.b16 %v1290, %v1290
        %1292 = vrot.lane.b32.xlu0 %v1291, 32
        %v1293 = vpop.permute.xlu0 %1292
        %v1295 = vunpack.c.l.b16 %v1259
        %v1296 = vpack.c.b16 %v1295, %v1295
        %1297 = vrot.lane.b32.xlu0 %v1296, 64
        %v1298 = vpop.permute.xlu0 %1297
        %v1300 = vunpack.c.l.b16 %v1265
        %v1301 = vpack.c.b16 %v1300, %v1300
        %1302 = vrot.lane.b32.xlu0 %v1301, 96
        %v1303 = vpop.permute.xlu0 %1302
        %v1305 = vunpack.c.l.b16 %v1277
        %v1306 = vpack.c.b16 %v1305, %v1305
        %1307 = vrot.lane.b32.xlu0 %v1306, 32
        %v1308 = vpop.permute.xlu0 %1307
        %v1310 = vunpack.c.l.b16 %v1283
        %v1311 = vpack.c.b16 %v1310, %v1310
        %1312 = vrot.lane.b32.xlu0 %v1311, 64
        %v1313 = vpop.permute.xlu0 %1312
        %v1316 = vsel %vm642, %v1288, %v1247
        %v1318 = vsel %vm789, %v1316, %v1293
        %v1320 = vsel %vm792, %v1318, %v1298
        %v1324 = vsel %vm642, %v1303, %v1271
        %v1326 = vsel %vm789, %v1324, %v1308
        %v1328 = vsel %vm792, %v1326, %v1313
        %s1330 = scalar_lea.vmem [#allocation11], 256
        %v1331 = vld [vmem:[%s1330] sm:$0xf]
        %v1332 = vld [vmem:[%s1330 + $0x4] sm:$0xf]
        %v1333 = vld [vmem:[%s1330 + $0x8] sm:$0xf]
        %v1334 = vld [vmem:[%s1330 + $0xc] sm:$0xf]
        %v1335 = vld [vmem:[%s1330 + $0x10] sm:$0xf]
        %v1336 = vld [vmem:[%s1330 + $0x14] sm:$0xf]
        %v1337 = vld [vmem:[%s1330 + $0x18] sm:$0xf]
        %v1338 = vld [vmem:[%s1330 + $0x1c] sm:$0xf]
        %v1339 = vld [vmem:[%s1330 + $0x20] sm:$0xf]
        %v1340 = vld [vmem:[%s1330 + $0x24] sm:$0xf]
        %v1341 = vld [vmem:[%s1330 + $0x28] sm:$0xf]
        %v1342 = vld [vmem:[%s1330 + $0x2c] sm:$0xf]
        %v1343 = vld [vmem:[%s1330 + $0x30] sm:$0xf]
        %v1344 = vld [vmem:[%s1330 + $0x34] sm:$0xf]
        %v1345 = vld [vmem:[%s1330 + $0x38] sm:$0xf]
        %v1346 = vld [vmem:[%s1330 + $0x3c] sm:$0xf]
        %v1347 = vld [vmem:[%s1330 + $0x40] sm:$0xf]
        %v1348 = vld [vmem:[%s1330 + $0x44] sm:$0xf]
        %v1349 = vld [vmem:[%s1330 + $0x48] sm:$0xf]
        %v1350 = vld [vmem:[%s1330 + $0x4c] sm:$0xf]
        %v1351 = vld [vmem:[%s1330 + $0x50] sm:$0xf]
        %v1352 = vld [vmem:[%s1330 + $0x54] sm:$0xf]
        %v1353 = vld [vmem:[%s1330 + $0x58] sm:$0xf]
        %v1354 = vld [vmem:[%s1330 + $0x5c] sm:$0xf]
        %v1355 = vld [vmem:[%s1330 + $0x60] sm:$0xf]
        %v1356 = vld [vmem:[%s1330 + $0x64] sm:$0xf]
        %v1357 = vld [vmem:[%s1330 + $0x68] sm:$0xf]
        %v1358 = vld [vmem:[%s1330 + $0x6c] sm:$0xf]
        %v1359 = vld [vmem:[%s1330 + $0x70] sm:$0xf]
        %v1360 = vld [vmem:[%s1330 + $0x74] sm:$0xf]
        %v1361 = vld [vmem:[%s1330 + $0x78] sm:$0xf]
        %v1362 = vld [vmem:[%s1330 + $0x7c] sm:$0xf]
        %v1395 = vunpack.c.l.b16 %v1331
        %v1396 = vunpack.c.l.b16 %v1332
        %v1397 = vunpack.c.l.b16 %v1333
        %v1398 = vunpack.c.l.b16 %v1334
        %v1399 = vunpack.c.l.b16 %v1335
        %v1400 = vunpack.c.l.b16 %v1336
        %v1401 = vunpack.c.l.b16 %v1337
        %v1402 = vunpack.c.l.b16 %v1338
        %v1403 = vunpack.c.l.b16 %v1339
        %v1404 = vunpack.c.l.b16 %v1340
        %v1405 = vunpack.c.l.b16 %v1341
        %v1406 = vunpack.c.l.b16 %v1342
        %v1407 = vunpack.c.l.b16 %v1343
        %v1408 = vunpack.c.l.b16 %v1344
        %v1409 = vunpack.c.l.b16 %v1345
        %v1410 = vunpack.c.l.b16 %v1346
        %v1411 = vunpack.c.l.b16 %v1347
        %v1412 = vunpack.c.l.b16 %v1348
        %v1413 = vunpack.c.l.b16 %v1349
        %v1414 = vunpack.c.l.b16 %v1350
        %v1415 = vunpack.c.l.b16 %v1351
        %v1416 = vunpack.c.l.b16 %v1352
        %v1417 = vunpack.c.l.b16 %v1353
        %v1418 = vunpack.c.l.b16 %v1354
        %v1419 = vunpack.c.l.b16 %v1355
        %v1420 = vunpack.c.l.b16 %v1356
        %v1421 = vunpack.c.l.b16 %v1357
        %v1422 = vunpack.c.l.b16 %v1358
        %v1423 = vunpack.c.l.b16 %v1359
        %v1424 = vunpack.c.l.b16 %v1360
        %v1425 = vunpack.c.l.b16 %v1361
        %v1426 = vunpack.c.l.b16 %v1362
        %v1427 = vpack.c.b16 %v1396, %v1395
        %v1428 = vpack.c.b16 %v1398, %v1397
        %v1429 = vpack.c.b16 %v1400, %v1399
        %v1430 = vpack.c.b16 %v1402, %v1401
        %v1431 = vpack.c.b16 %v1404, %v1403
        %v1432 = vpack.c.b16 %v1406, %v1405
        %v1433 = vpack.c.b16 %v1408, %v1407
        %v1434 = vpack.c.b16 %v1410, %v1409
        %v1435 = vpack.c.b16 %v1412, %v1411
        %v1436 = vpack.c.b16 %v1414, %v1413
        %v1437 = vpack.c.b16 %v1416, %v1415
        %v1438 = vpack.c.b16 %v1418, %v1417
        %v1439 = vpack.c.b16 %v1420, %v1419
        %v1440 = vpack.c.b16 %v1422, %v1421
        %v1441 = vpack.c.b16 %v1424, %v1423
        %v1442 = vpack.c.b16 %v1426, %v1425
        %1459 = vmatpush.bf16.msra.mxu0 %v1434
        %1460 = vmatpush.bf16.msra.mxu0 %v1433
        %1461 = vmatpush.bf16.msra.mxu0 %v1432
        %1462 = vmatpush.bf16.msra.mxu0 %v1431
        %1463 = vmatpush.bf16.msra.mxu0 %v1430
        %1464 = vmatpush.bf16.msra.mxu0 %v1429
        %1465 = vmatpush.bf16.msra.mxu0 %v1428
        %1466 = vmatpush.bf16.msra.mxu0 %v1427
        %1467 = vmatmul.bf16.gmra.mxu0 %v1320
        %v1468 = vpop.f32.mrf.mxu0
        %v1469 = vadd.f32 0.0, %v1468
        %v1470 = vpop.f32.mrf.mxu0
        %1471 = vdwg.mxu0
        %1472 = vmatpush.bf16.msra.mxu0 %v1442
        %1473 = vmatpush.bf16.msra.mxu0 %v1441
        %1474 = vmatpush.bf16.msra.mxu0 %v1440
        %1475 = vmatpush.bf16.msra.mxu0 %v1439
        %1476 = vmatpush.bf16.msra.mxu0 %v1438
        %1477 = vmatpush.bf16.msra.mxu0 %v1437
        %1478 = vmatpush.bf16.msra.mxu0 %v1436
        %1479 = vmatpush.bf16.msra.mxu0 %v1435
        %1480 = vmatmul.bf16.gmra.mxu0 %v1328
        %v1481 = vpop.f32.mrf.mxu0
        %v1482 = vadd.f32 %v1469, %v1481
        %v1483 = vpop.f32.mrf.mxu0
        %1484 = vdwg.mxu0
        %v1485 = vadd.f32 %v1235, %v1482
        %1486 = vset.pattern.permute.xlu0 24
        %1487 = vperm.xlu0 %1486, %v699
        %v1488 = vpop.permute.xlu0 %1487
        %v1490 = vmul.f32 %v1488, %v664
        %v1491 = vpack.c.bf16 %v1490, %v1490
        %1492 = vset.pattern.permute.xlu0 25
        %1493 = vperm.xlu0 %1492, %v699
        %v1494 = vpop.permute.xlu0 %1493
        %v1496 = vmul.f32 %v1494, %v664
        %v1497 = vpack.c.bf16 %v1496, %v1496
        %1498 = vset.pattern.permute.xlu0 26
        %1499 = vperm.xlu0 %1498, %v699
        %v1500 = vpop.permute.xlu0 %1499
        %v1502 = vmul.f32 %v1500, %v664
        %v1503 = vpack.c.bf16 %v1502, %v1502
        %1504 = vset.pattern.permute.xlu0 27
        %1505 = vperm.xlu0 %1504, %v699
        %v1506 = vpop.permute.xlu0 %1505
        %v1508 = vmul.f32 %v1506, %v664
        %v1509 = vpack.c.bf16 %v1508, %v1508
        %1510 = vset.pattern.permute.xlu0 28
        %1511 = vperm.xlu0 %1510, %v699
        %v1512 = vpop.permute.xlu0 %1511
        %v1514 = vmul.f32 %v1512, %v664
        %v1515 = vpack.c.bf16 %v1514, %v1514
        %1516 = vset.pattern.permute.xlu0 29
        %1517 = vperm.xlu0 %1516, %v699
        %v1518 = vpop.permute.xlu0 %1517
        %v1520 = vmul.f32 %v1518, %v664
        %v1521 = vpack.c.bf16 %v1520, %v1520
        %1522 = vset.pattern.permute.xlu0 30
        %1523 = vperm.xlu0 %1522, %v699
        %v1524 = vpop.permute.xlu0 %1523
        %v1526 = vmul.f32 %v1524, %v664
        %v1527 = vpack.c.bf16 %v1526, %v1526
        %1528 = vset.pattern.permute.xlu0 31
        %1529 = vperm.xlu0 %1528, %v699
        %v1530 = vpop.permute.xlu0 %1529
        %v1532 = vmul.f32 %v1530, %v664
        %v1533 = vpack.c.bf16 %v1532, %v1532
        %v1535 = vunpack.c.l.b16 %v1491
        %v1536 = vpack.c.b16 %v1535, %v1535
        %1537 = vrot.lane.b32.xlu0 %v1536, 96
        %v1538 = vpop.permute.xlu0 %1537
        %v1540 = vunpack.c.l.b16 %v1503
        %v1541 = vpack.c.b16 %v1540, %v1540
        %1542 = vrot.lane.b32.xlu0 %v1541, 32
        %v1543 = vpop.permute.xlu0 %1542
        %v1545 = vunpack.c.l.b16 %v1509
        %v1546 = vpack.c.b16 %v1545, %v1545
        %1547 = vrot.lane.b32.xlu0 %v1546, 64
        %v1548 = vpop.permute.xlu0 %1547
        %v1550 = vunpack.c.l.b16 %v1515
        %v1551 = vpack.c.b16 %v1550, %v1550
        %1552 = vrot.lane.b32.xlu0 %v1551, 96
        %v1553 = vpop.permute.xlu0 %1552
        %v1555 = vunpack.c.l.b16 %v1527
        %v1556 = vpack.c.b16 %v1555, %v1555
        %1557 = vrot.lane.b32.xlu0 %v1556, 32
        %v1558 = vpop.permute.xlu0 %1557
        %v1560 = vunpack.c.l.b16 %v1533
        %v1561 = vpack.c.b16 %v1560, %v1560
        %1562 = vrot.lane.b32.xlu0 %v1561, 64
        %v1563 = vpop.permute.xlu0 %1562
        %v1566 = vsel %vm642, %v1538, %v1497
        %v1568 = vsel %vm789, %v1566, %v1543
        %v1570 = vsel %vm792, %v1568, %v1548
        %v1574 = vsel %vm642, %v1553, %v1521
        %v1576 = vsel %vm789, %v1574, %v1558
        %v1578 = vsel %vm792, %v1576, %v1563
        %s1580 = scalar_lea.vmem [#allocation11], 384
        %v1581 = vld [vmem:[%s1580] sm:$0xf]
        %v1582 = vld [vmem:[%s1580 + $0x4] sm:$0xf]
        %v1583 = vld [vmem:[%s1580 + $0x8] sm:$0xf]
        %v1584 = vld [vmem:[%s1580 + $0xc] sm:$0xf]
        %v1585 = vld [vmem:[%s1580 + $0x10] sm:$0xf]
        %v1586 = vld [vmem:[%s1580 + $0x14] sm:$0xf]
        %v1587 = vld [vmem:[%s1580 + $0x18] sm:$0xf]
        %v1588 = vld [vmem:[%s1580 + $0x1c] sm:$0xf]
        %v1589 = vld [vmem:[%s1580 + $0x20] sm:$0xf]
        %v1590 = vld [vmem:[%s1580 + $0x24] sm:$0xf]
        %v1591 = vld [vmem:[%s1580 + $0x28] sm:$0xf]
        %v1592 = vld [vmem:[%s1580 + $0x2c] sm:$0xf]
        %v1593 = vld [vmem:[%s1580 + $0x30] sm:$0xf]
        %v1594 = vld [vmem:[%s1580 + $0x34] sm:$0xf]
        %v1595 = vld [vmem:[%s1580 + $0x38] sm:$0xf]
        %v1596 = vld [vmem:[%s1580 + $0x3c] sm:$0xf]
        %v1597 = vld [vmem:[%s1580 + $0x40] sm:$0xf]
        %v1598 = vld [vmem:[%s1580 + $0x44] sm:$0xf]
        %v1599 = vld [vmem:[%s1580 + $0x48] sm:$0xf]
        %v1600 = vld [vmem:[%s1580 + $0x4c] sm:$0xf]
        %v1601 = vld [vmem:[%s1580 + $0x50] sm:$0xf]
        %v1602 = vld [vmem:[%s1580 + $0x54] sm:$0xf]
        %v1603 = vld [vmem:[%s1580 + $0x58] sm:$0xf]
        %v1604 = vld [vmem:[%s1580 + $0x5c] sm:$0xf]
        %v1605 = vld [vmem:[%s1580 + $0x60] sm:$0xf]
        %v1606 = vld [vmem:[%s1580 + $0x64] sm:$0xf]
        %v1607 = vld [vmem:[%s1580 + $0x68] sm:$0xf]
        %v1608 = vld [vmem:[%s1580 + $0x6c] sm:$0xf]
        %v1609 = vld [vmem:[%s1580 + $0x70] sm:$0xf]
        %v1610 = vld [vmem:[%s1580 + $0x74] sm:$0xf]
        %v1611 = vld [vmem:[%s1580 + $0x78] sm:$0xf]
        %v1612 = vld [vmem:[%s1580 + $0x7c] sm:$0xf]
        %v1645 = vunpack.c.l.b16 %v1581
        %v1646 = vunpack.c.l.b16 %v1582
        %v1647 = vunpack.c.l.b16 %v1583
        %v1648 = vunpack.c.l.b16 %v1584
        %v1649 = vunpack.c.l.b16 %v1585
        %v1650 = vunpack.c.l.b16 %v1586
        %v1651 = vunpack.c.l.b16 %v1587
        %v1652 = vunpack.c.l.b16 %v1588
        %v1653 = vunpack.c.l.b16 %v1589
        %v1654 = vunpack.c.l.b16 %v1590
        %v1655 = vunpack.c.l.b16 %v1591
        %v1656 = vunpack.c.l.b16 %v1592
        %v1657 = vunpack.c.l.b16 %v1593
        %v1658 = vunpack.c.l.b16 %v1594
        %v1659 = vunpack.c.l.b16 %v1595
        %v1660 = vunpack.c.l.b16 %v1596
        %v1661 = vunpack.c.l.b16 %v1597
        %v1662 = vunpack.c.l.b16 %v1598
        %v1663 = vunpack.c.l.b16 %v1599
        %v1664 = vunpack.c.l.b16 %v1600
        %v1665 = vunpack.c.l.b16 %v1601
        %v1666 = vunpack.c.l.b16 %v1602
        %v1667 = vunpack.c.l.b16 %v1603
        %v1668 = vunpack.c.l.b16 %v1604
        %v1669 = vunpack.c.l.b16 %v1605
        %v1670 = vunpack.c.l.b16 %v1606
        %v1671 = vunpack.c.l.b16 %v1607
        %v1672 = vunpack.c.l.b16 %v1608
        %v1673 = vunpack.c.l.b16 %v1609
        %v1674 = vunpack.c.l.b16 %v1610
        %v1675 = vunpack.c.l.b16 %v1611
        %v1676 = vunpack.c.l.b16 %v1612
        %v1677 = vpack.c.b16 %v1646, %v1645
        %v1678 = vpack.c.b16 %v1648, %v1647
        %v1679 = vpack.c.b16 %v1650, %v1649
        %v1680 = vpack.c.b16 %v1652, %v1651
        %v1681 = vpack.c.b16 %v1654, %v1653
        %v1682 = vpack.c.b16 %v1656, %v1655
        %v1683 = vpack.c.b16 %v1658, %v1657
        %v1684 = vpack.c.b16 %v1660, %v1659
        %v1685 = vpack.c.b16 %v1662, %v1661
        %v1686 = vpack.c.b16 %v1664, %v1663
        %v1687 = vpack.c.b16 %v1666, %v1665
        %v1688 = vpack.c.b16 %v1668, %v1667
        %v1689 = vpack.c.b16 %v1670, %v1669
        %v1690 = vpack.c.b16 %v1672, %v1671
        %v1691 = vpack.c.b16 %v1674, %v1673
        %v1692 = vpack.c.b16 %v1676, %v1675
        %1709 = vmatpush.bf16.msra.mxu0 %v1684
        %1710 = vmatpush.bf16.msra.mxu0 %v1683
        %1711 = vmatpush.bf16.msra.mxu0 %v1682
        %1712 = vmatpush.bf16.msra.mxu0 %v1681
        %1713 = vmatpush.bf16.msra.mxu0 %v1680
        %1714 = vmatpush.bf16.msra.mxu0 %v1679
        %1715 = vmatpush.bf16.msra.mxu0 %v1678
        %1716 = vmatpush.bf16.msra.mxu0 %v1677
        %1717 = vmatmul.bf16.gmra.mxu0 %v1570
        %v1718 = vpop.f32.mrf.mxu0
        %v1719 = vadd.f32 0.0, %v1718
        %v1720 = vpop.f32.mrf.mxu0
        %1721 = vdwg.mxu0
        %1722 = vmatpush.bf16.msra.mxu0 %v1692
        %1723 = vmatpush.bf16.msra.mxu0 %v1691
        %1724 = vmatpush.bf16.msra.mxu0 %v1690
        %1725 = vmatpush.bf16.msra.mxu0 %v1689
        %1726 = vmatpush.bf16.msra.mxu0 %v1688
        %1727 = vmatpush.bf16.msra.mxu0 %v1687
        %1728 = vmatpush.bf16.msra.mxu0 %v1686
        %1729 = vmatpush.bf16.msra.mxu0 %v1685
        %1730 = vmatmul.bf16.gmra.mxu0 %v1578
        %v1731 = vpop.f32.mrf.mxu0
        %v1732 = vadd.f32 %v1719, %v1731
        %v1733 = vpop.f32.mrf.mxu0
        %1734 = vdwg.mxu0
        %v1735 = vadd.f32 %v1485, %v1732
        %1736 = vadd.xlane.f32.xlu0 %v1735
        %v1737 = vpop.xlane.xlu0 %1736
        %v1738 = vrcp.pop 128.0
        %v1739 = vmul.f32 128.0, %v1738
        %v1740 = vsub.f32 1.0, %v1739
        %v1741 = vmul.f32 %v1738, %v1740
        %v1742 = vadd.f32 %v1738, %v1741
        %vm1743 = vweird.f32 %v1738
        %v1744 = vsel %vm1743, %v1738, %v1742
        %v1745 = vmul.f32 %v1737, %v1744
        %v1746 = vsub.f32 %v1735, %v1745
        %v1747 = vmul.f32 %v1746, %v1746
        %1748 = vadd.xlane.f32.xlu0 %v1747
        %v1749 = vpop.xlane.xlu0 %1748
        %v1750 = vmul.f32 %v1749, %v1744
        %v1751 = vadd.f32 %v1750, 1e-05
        %v1752 = vrsqrt.pop %v1751
        %v1753 = vmul.f32 %v1752, %v1751
        %v1754 = vmul.f32 %v1753, %v1752
        %v1755 = vmul.f32 0.5, %v1754
        %v1756 = vsub.f32 1.5, %v1755
        %v1757 = vmul.f32 %v1752, %v1756
        %vm1758 = vweird.f32 %v1751
        %vm1759 = vweird.f32 %v1752
        %vm1760 = vmor %vm1758, %vm1759
        %v1761 = vsel %vm1760, %v1752, %v1757
        %v1762 = vld [vmem:[%s9] sm:$0x1]
        %v1764 = vperm.slane %v1762, 0
        %v1766 = vmul.f32 %v1761, %v1764
        %v1767 = vmul.f32 %v1746, %v1766
        %v1768 = vld [vmem:[%s10] sm:$0x1]
        %v1770 = vperm.slane %v1768, 0
        %v1772 = vadd.f32 %v1767, %v1770
        %v1773 = vmax.f32 %v1772, 0.0
        %v1774 = vpack.c.bf16 %v1773, %v1773
        %v1775 = vld [vmem:[#allocation14] sm:$0xf]
        %v1776 = vld [vmem:[#allocation14 + $0x4] sm:$0xf]
        %v1777 = vld [vmem:[#allocation14 + $0x8] sm:$0xf]
        %v1778 = vld [vmem:[#allocation14 + $0xc] sm:$0xf]
        %v1779 = vld [vmem:[#allocation14 + $0x10] sm:$0xf]
        %v1780 = vld [vmem:[#allocation14 + $0x14] sm:$0xf]
        %v1781 = vld [vmem:[#allocation14 + $0x18] sm:$0xf]
        %v1782 = vld [vmem:[#allocation14 + $0x1c] sm:$0xf]
        %v1783 = vld [vmem:[#allocation14 + $0x20] sm:$0xf]
        %v1784 = vld [vmem:[#allocation14 + $0x24] sm:$0xf]
        %v1785 = vld [vmem:[#allocation14 + $0x28] sm:$0xf]
        %v1786 = vld [vmem:[#allocation14 + $0x2c] sm:$0xf]
        %v1787 = vld [vmem:[#allocation14 + $0x30] sm:$0xf]
        %v1788 = vld [vmem:[#allocation14 + $0x34] sm:$0xf]
        %v1789 = vld [vmem:[#allocation14 + $0x38] sm:$0xf]
        %v1790 = vld [vmem:[#allocation14 + $0x3c] sm:$0xf]
        %v1791 = vld [vmem:[%s12] sm:$0x1]
        %v1793 = vperm.slane %v1791, 0
        %v1811 = vunpack.c.l.b16 %v1775
        %v1812 = vunpack.c.l.b16 %v1776
        %v1813 = vunpack.c.l.b16 %v1777
        %v1814 = vunpack.c.l.b16 %v1778
        %v1815 = vunpack.c.l.b16 %v1779
        %v1816 = vunpack.c.l.b16 %v1780
        %v1817 = vunpack.c.l.b16 %v1781
        %v1818 = vunpack.c.l.b16 %v1782
        %v1819 = vunpack.c.l.b16 %v1783
        %v1820 = vunpack.c.l.b16 %v1784
        %v1821 = vunpack.c.l.b16 %v1785
        %v1822 = vunpack.c.l.b16 %v1786
        %v1823 = vunpack.c.l.b16 %v1787
        %v1824 = vunpack.c.l.b16 %v1788
        %v1825 = vunpack.c.l.b16 %v1789
        %v1826 = vunpack.c.l.b16 %v1790
        %v1827 = vpack.c.b16 %v1812, %v1811
        %v1828 = vpack.c.b16 %v1814, %v1813
        %v1829 = vpack.c.b16 %v1816, %v1815
        %v1830 = vpack.c.b16 %v1818, %v1817
        %v1831 = vpack.c.b16 %v1820, %v1819
        %v1832 = vpack.c.b16 %v1822, %v1821
        %v1833 = vpack.c.b16 %v1824, %v1823
        %v1834 = vpack.c.b16 %v1826, %v1825
        %1843 = vmatpush.bf16.msra.mxu0 %v1834
        %1844 = vmatpush.bf16.msra.mxu0 %v1833
        %1845 = vmatpush.bf16.msra.mxu0 %v1832
        %1846 = vmatpush.bf16.msra.mxu0 %v1831
        %1847 = vmatpush.bf16.msra.mxu0 %v1830
        %1848 = vmatpush.bf16.msra.mxu0 %v1829
        %1849 = vmatpush.bf16.msra.mxu0 %v1828
        %1850 = vmatpush.bf16.msra.mxu0 %v1827
        %1851 = vmatmul.bf16.gmra.mxu0 %v1774
        %v1852 = vpop.f32.mrf.mxu0
        %v1853 = vadd.f32 %v1793, %v1852
        %v1854 = vpop.f32.mrf.mxu0
        %1855 = vdwg.mxu0
        %1856 = vst [vmem:[%s595] sm:$0xff] %v1853
        %s1857 = sand.u32 %s327, 1
        %s1858 = scalar_lea.sflag [#allocation4], %s1857
        %s1859 = sand.u32 %s327, 1
        %s1860 = smul.addr %s1859, 8
        %s1861 = scalar_lea.vmem [#allocation16], %s1860
        // Predicated region
        $region105: #{tpu_custom_call.1} parent=71 // pred_check
          %p1862 = pneg %p337
        $region106: #{tpu_custom_call.1} parent=71 // pred_check_branch
          %1864 = sbr.rel (%p1862) target = $region108
        $region107: #{tpu_custom_call.1} parent=71 // pred_region
          %1866 = vsyncadd %s1858, 0
          %s1867 = smul.addr %s36, 8
          %s1868 = scalar_lea.hbm %s13, %s1867
          %s1870 = sshll.u32 %s1861, 4
          %s1871 = int_to_ptr.vmem [resolvable:$true] %s1870
          %s1872 = sshll.u32 %s1868, 4
          %s1873 = int_to_ptr.hbm [resolvable:$true] %s1872
          %1875 = dma.vmem_to_hbm [thread:$0]  %s1871, 128, %s1873, %s1858
        $region108: #{tpu_custom_call.1} parent=71 // pred_fallthru
          _
      $region72: #{tpu_custom_call.1} parent=5 // pred_fallthru
        _
      %p1876 = scmp.le.s32.totalorder 2, %s31
      // Predicated region
      $region109: #{tpu_custom_call.1} parent=5 // pred_check
        %p1877 = pneg %p1876
      $region110: #{tpu_custom_call.1} parent=5 // pred_check_branch
        %1879 = sbr.rel (%p1877) target = $region112
      $region111: #{tpu_custom_call.1} parent=5 // pred_region
        %s1880 = ssub.s32 %s31, 2
        // Predicated region
        $region113: #{tpu_custom_call.1} parent=111 // pred_check
          %p1881 = pneg %p343
        $region114: #{tpu_custom_call.1} parent=111 // pred_check_branch
          %1883 = sbr.rel (%p1881) target = $region116
        $region115: #{tpu_custom_call.1} parent=111 // pred_region
          %s1884 = sand.u32 %s328, 1
          %s1885 = scalar_lea.sflag [#allocation4], %s1884
          %s1886 = sand.u32 %s328, 1
          %s1887 = smul.addr %s1886, 8
          %s1888 = scalar_lea.vmem [#allocation16], %s1887
          %1890 = dma.done %s1885, 128
        $region116: #{tpu_custom_call.1} parent=111 // pred_fallthru
          _
      $region112: #{tpu_custom_call.1} parent=5 // pred_fallthru
        _
    $region6: #{tpu_custom_call.1} parent=1 // loop_footer
      %s35 = sadd.s32 1, %s31
    $region7: #{tpu_custom_call.1} parent=1 // loop_footer_branch
      %30 = sbr.rel target = $region3
    $region8: #{tpu_custom_call.1} parent=1 // loop_exit
      _
    %1891 = vsyncpa [#allocation3], 1
    %s1892 = scalar_lea.sflag [#allocation3], 1
    %1893 = vsyncpa %s1892, 1
    %1894 = vsyncpa [#allocation6], 1
    %s1895 = scalar_lea.sflag [#allocation6], 1
    %1896 = vsyncpa %s1895, 1
    %1897 = vsyncpa [#allocation9], 1
    %1898 = vsyncpa [#allocation12], 1
    %1899 = vsyncpa [#allocation15], 1
    %1900 = vsyncpa [#allocation4], 1
    %s1901 = scalar_lea.sflag [#allocation4], 1
    %1902 = vsyncpa %s1901, 1

</llo_original>
